<compile_context>
chip_gen: v6e
topology: v6e:2x2x1
jax: 0.10.0
libtpu: 0.0.40
codegen_flags: <defaults>
</compile_context>

<pallas_src>
import functools

import numpy as np
import jax
import jax.numpy as jnp
from jax.experimental import pallas as pl
from jax.experimental.pallas import tpu as pltpu


_VMEM_LIMIT = 32 * 1024 * 1024      # explicit scoped-VMEM limit (safe on v5e/v6e/v7x)


# ----------------- deterministic constants (JPEG spec tables, as in DiffJPEG) ------------

_Y_TABLE = np.array(
    [[16, 11, 10, 16, 24, 40, 51, 61],
     [12, 12, 14, 19, 26, 58, 60, 55],
     [14, 13, 16, 24, 40, 57, 69, 56],
     [14, 17, 22, 29, 51, 87, 80, 62],
     [18, 22, 37, 56, 68, 109, 103, 77],
     [24, 35, 55, 64, 81, 104, 113, 92],
     [49, 64, 78, 87, 103, 121, 120, 101],
     [72, 92, 95, 98, 112, 100, 103, 99]], dtype=np.float32).T

_C_TABLE = np.full((8, 8), 99.0, dtype=np.float32)
_C_TABLE[:4, :4] = np.array([[17, 18, 24, 47],
                             [18, 21, 26, 66],
                             [24, 26, 56, 99],
                             [47, 66, 99, 99]], dtype=np.float32).T


def _dct_matrix():
    a = np.ones(8, dtype=np.float64)
    a[0] = 1.0 / np.sqrt(2.0)
    t = np.zeros((8, 8), dtype=np.float64)
    for u in range(8):
        for x in range(8):
            t[u, x] = 0.5 * a[u] * np.cos((2 * x + 1) * u * np.pi / 16.0)
    return t


def _quality_to_factor(quality):
    if quality < 50:
        q = 5000.0 / quality
    else:
        q = 200.0 - quality * 2
    return q / 100.0


def _default_pack():
    """8x8 blocks packed per kernel row: 2 on 128x128-MXU parts (<= v5), 4 on v6e/v7x."""
    try:
        kind = jax.devices()[0].device_kind.lower()
    except Exception:
        return 4
    if any(s in kind for s in ("v2", "v3", "v4", "v5")):
        return 2
    return 4


@functools.lru_cache(maxsize=None)
def _dct_operators(pack, quality):
    """Block-diagonal DCT / IDCT operators with the quant scales folded in (numpy f32)."""
    factor = _quality_to_factor(quality)
    t = _dct_matrix()
    m64 = np.kron(t, t)                        # row-major vec: vec(T X T^T) = m64 @ vec(X)
    m_big = np.kron(np.eye(pack), m64)         # block-diagonal over the packed blocks
    mt_big = m_big.T
    out = []
    for tbl in (_Y_TABLE, _C_TABLE):
        q = np.tile(tbl.reshape(64).astype(np.float64) * factor, pack)
        mtq = (mt_big * (1.0 / q)[None, :]).astype(np.float32)   # fwd DCT + quantize
        mq = (q[:, None] * m_big).astype(np.float32)             # dequantize + inv DCT
        out.append((mtq, mq))
    return tuple(out)


@functools.lru_cache(maxsize=None)
def _chroma_resample_mats(w):
    """2x2 avg-pool / nearest-upsample operators on the (rows, 2W) row-pair view."""
    w2, wh = 2 * w, w // 2
    p = np.zeros((w2, wh), np.float32)
    for j in range(wh):
        for e in (2 * j, 2 * j + 1, w + 2 * j, w + 2 * j + 1):
            p[e, j] = 0.25
    u = (4.0 * p.T).astype(np.float32)
    return p, u


# ------------------------------------ Pallas kernels -------------------------------------

def _fwd_color_kernel(x_ref, p_ref, y_ref, c_ref):
    # x_ref: (1, 3, TH, 2W) RGB in [0,1]; each kernel row carries two image rows.
    # p_ref: (2W, W/2)      2x2 average-pool operator (resident).
    # y_ref: (1, TH, 2W)    luma in [0, 255]  (*255 scale fused here).
    # c_ref: (2, 1, TH, W/2) 4:2:0-subsampled Cb / Cr (+128 offset).
    r = x_ref[0, 0, :, :] * 255.0
    g = x_ref[0, 1, :, :] * 255.0
    b = x_ref[0, 2, :, :] * 255.0
    y_ref[0, :, :] = 0.299 * r + 0.587 * g + 0.114 * b
    cb = -0.168736 * r - 0.331264 * g + 0.5 * b + 128.0
    cr = 0.5 * r - 0.418688 * g - 0.081312 * b + 128.0
    p = p_ref[...]
    c_ref[0, 0, :, :] = jnp.dot(cb, p, preferred_element_type=jnp.float32)
    c_ref[1, 0, :, :] = jnp.dot(cr, p, preferred_element_type=jnp.float32)


def _inv_color_kernel(y_ref, c_ref, u_ref, o_ref):
    # y_ref: (1, TH, 2W); c_ref: (2, 1, TH, W/2); u_ref: (W/2, 2W) nearest-upsample op.
    # o_ref: (1, 3, TH, 2W) RGB in [0, 1]  (clip + /255 fused here).
    y = y_ref[0, :, :]
    u = u_ref[...]
    cb = jnp.dot(c_ref[0, 0, :, :], u, preferred_element_type=jnp.float32) - 128.0
    cr = jnp.dot(c_ref[1, 0, :, :], u, preferred_element_type=jnp.float32) - 128.0
    inv255 = jnp.float32(1.0 / 255.0)
    o_ref[0, 0, :, :] = jnp.clip(y + 1.402 * cr, 0.0, 255.0) * inv255
    o_ref[0, 1, :, :] = jnp.clip(y - 0.344136 * cb - 0.714136 * cr, 0.0, 255.0) * inv255
    o_ref[0, 2, :, :] = jnp.clip(y + 1.772 * cb, 0.0, 255.0) * inv255


def _jpeg_block_kernel(x_ref, mtq_ref, mq_ref, o_ref):
    # x_ref  : (TN, PACK*64) bf16 -- PACK flattened 8x8 pixel blocks per row.
    # mtq_ref: (PACK*64, PACK*64) bf16 -- kron(I, M64)^T with 1/(q*factor) folded in cols.
    # mq_ref : (PACK*64, PACK*64) bf16 -- kron(I, M64)   with   (q*factor) folded in rows.
    # o_ref  : (TN, PACK*64) f32 reconstructed pixel blocks.
    x = x_ref[...] - 128.0                                                   # demean
    scaled = jnp.dot(x, mtq_ref[...], preferred_element_type=jnp.float32)    # DCT + quant
    rnd = jnp.round(scaled)
    rounded = rnd + (scaled - rnd) ** 3                                      # diff. rounding
    o_ref[...] = jnp.dot(rounded.astype(jnp.bfloat16), mq_ref[...],
                         preferred_element_type=jnp.float32) + 128.0         # dequant + IDCT


# --------------------------------- kernel call wrappers ----------------------------------

def _color_row_tile(rows, w2, max_elems=1 << 17, max_rows=1024):
    """Row-tile (multiple of 8, divides `rows`) for the (rows, 2W) color layout."""
    cap = max(8, min(max_rows, (max_elems // max(w2, 1)) // 8 * 8))
    t = max(8, min(rows, cap) // 8 * 8)
    while rows % t:
        t -= 8
    if t == rows and rows >= 16 and (rows // 2) % 8 == 0:
        t = rows // 2            # keep the row grid >= 2 (feeds both v7x TensorCores)
    return t


def _fwd_color(xv, pool_mat):
    b, _, hh, w2 = xv.shape
    wh = pool_mat.shape[1]
    th = _color_row_tile(hh, w2)
    grid = (b, hh // th)
    return pl.pallas_call(
        _fwd_color_kernel,
        out_shape=(jax.ShapeDtypeStruct((b, hh, w2), jnp.float32),
                   jax.ShapeDtypeStruct((2, b, hh, wh), jnp.float32)),
        grid=grid,
        in_specs=[pl.BlockSpec((1, 3, th, w2), lambda bi, ri: (bi, 0, ri, 0)),
                  pl.BlockSpec((w2, wh), lambda bi, ri: (0, 0))],
        out_specs=(pl.BlockSpec((1, th, w2), lambda bi, ri: (bi, ri, 0)),
                   pl.BlockSpec((2, 1, th, wh), lambda bi, ri: (0, bi, ri, 0))),
        compiler_params=pltpu.CompilerParams(
            dimension_semantics=("parallel", "parallel"),
            vmem_limit_bytes=_VMEM_LIMIT),
    )(xv, pool_mat)


def _inv_color(y, c, up_mat):
    b, hh, w2 = y.shape
    wh = c.shape[-1]
    th = _color_row_tile(hh, w2)
    grid = (b, hh // th)
    return pl.pallas_call(
        _inv_color_kernel,
        out_shape=jax.ShapeDtypeStruct((b, 3, hh, w2), jnp.float32),
        grid=grid,
        in_specs=[pl.BlockSpec((1, th, w2), lambda bi, ri: (bi, ri, 0)),
                  pl.BlockSpec((2, 1, th, wh), lambda bi, ri: (0, bi, ri, 0)),
                  pl.BlockSpec((wh, w2), lambda bi, ri: (0, 0))],
        out_specs=pl.BlockSpec((1, 3, th, w2), lambda bi, ri: (bi, 0, ri, 0)),
        compiler_params=pltpu.CompilerParams(
            dimension_semantics=("parallel", "parallel"),
            vmem_limit_bytes=_VMEM_LIMIT),
    )(y, c, up_mat)


def _block_row_tile(rows, max_rows=2048):
    """(tile, grid, pad_rows) for the (rows, PACK*64) packed block matrix."""
    if rows <= max_rows:
        if rows >= 16 and rows % 16 == 0:
            return rows // 2, 2, 0          # grid >= 2 keeps both v7x TCs busy
        return rows, 1, 0
    t = max_rows // 8 * 8
    while t >= 8 and rows % t:
        t -= 8
    if t >= 8:
        return t, rows // t, 0
    t = max_rows // 8 * 8
    g = -(-rows // t)
    return t, g, g * t - rows


def _jpeg_blocks(blocks, mtq, mq, pack):
    """blocks: (n, 64) bf16 flattened 8x8 pixel blocks. Returns reconstructed (n, 64) f32."""
    n = blocks.shape[0]
    lanes = 64 * pack
    rows = -(-n // pack)
    tn, grid, pad_rows = _block_row_tile(rows)
    rows_tot = rows + pad_rows
    n_pad = rows_tot * pack
    if n_pad != n:
        blocks = jnp.concatenate(
            [blocks, jnp.zeros((n_pad - n, 64), blocks.dtype)], axis=0)
    xp = blocks.reshape(rows_tot, lanes)

    out = pl.pallas_call(
        _jpeg_block_kernel,
        out_shape=jax.ShapeDtypeStruct((rows_tot, lanes), jnp.float32),
        grid=(grid,),
        in_specs=[pl.BlockSpec((tn, lanes), lambda i: (i, 0)),
                  pl.BlockSpec((lanes, lanes), lambda i: (0, 0)),   # resident operator
                  pl.BlockSpec((lanes, lanes), lambda i: (0, 0))],  # resident operator
        out_specs=pl.BlockSpec((tn, lanes), lambda i: (i, 0)),
        compiler_params=pltpu.CompilerParams(
            dimension_semantics=("parallel",), vmem_limit_bytes=_VMEM_LIMIT),
    )(xp, mtq, mq)
    return out.reshape(rows_tot * pack, 64)[:n]


# ------------------------------------- JAX glue -------------------------------------------

def _block_split(im):
    """(B, H, W) plane -> (B*(H/8)*(W/8), 64) flattened 8x8 blocks, cast to bf16."""
    b, h, w = im.shape
    blk = im.reshape(b, h // 8, 8, w // 8, 8).transpose(0, 1, 3, 2, 4).reshape(-1, 64)
    return blk.astype(jnp.bfloat16)


def _block_merge(blocks, b, h, w):
    return blocks.reshape(b, h // 8, w // 8, 8, 8).transpose(0, 1, 3, 2, 4).reshape(b, h, w)


def diff_jpeg(x, quality=80):
    """Differentiable JPEG round-trip (DiffJPEG_c forward) on NCHW RGB in [0, 1]."""
    b, c, h, w = x.shape
    assert c == 3 and h % 16 == 0 and w % 16 == 0
    if not (0 < quality < 100):
        raise ValueError("quality must be in (0, 100): q >= 100 zeroes the quant tables")

    pack = _default_pack()
    (mtq_y_np, mq_y_np), (mtq_c_np, mq_c_np) = _dct_operators(pack, float(quality))
    mtq_y = jnp.asarray(mtq_y_np, jnp.bfloat16)
    mq_y = jnp.asarray(mq_y_np, jnp.bfloat16)
    mtq_c = jnp.asarray(mtq_c_np, jnp.bfloat16)
    mq_c = jnp.asarray(mq_c_np, jnp.bfloat16)
    p_np, u_np = _chroma_resample_mats(w)
    pool_mat = jnp.asarray(p_np)
    up_mat = jnp.asarray(u_np)

    # (B,3,H,W) -> (B,3,H/2,2W): each kernel row carries two consecutive image rows
    # (free contiguous reshape), so the 2x2 chroma pool / nearest upsample become a
    # single lane-axis matmul inside the fused color kernels.
    xv = x.astype(jnp.float32).reshape(b, 3, h // 2, 2 * w)
    y, chroma = _fwd_color(xv, pool_mat)          # y:(B,H/2,2W), chroma:(2,B,H/2,W/2)

    # per-8x8-block DCT -> quantize -> diff-round -> dequantize -> IDCT (bf16 MXU matmuls)
    y_rec = _jpeg_blocks(_block_split(y.reshape(b, h, w)), mtq_y, mq_y, pack)
    c_rec = _jpeg_blocks(_block_split(chroma.reshape(2 * b, h // 2, w // 2)),
                         mtq_c, mq_c, pack)       # Cb and Cr share one call / table

    y_m = _block_merge(y_rec, b, h, w).reshape(b, h // 2, 2 * w)
    c_m = _block_merge(c_rec, 2 * b, h // 2, w // 2).reshape(2, b, h // 2, w // 2)

    x_hat = _inv_color(y_m, c_m, up_mat)          # upsample + YCbCr->RGB + clip + /255
    return x_hat.reshape(b, 3, h, w)


class CodecJPEG:
    """JAX/Pallas equivalent of the PyTorch codec_JPEG module's forward pass."""

    def __init__(self, patch_sz=16, quality=80):
        self.patch_sz = patch_sz
        self.quality = quality
        # TODO(synk): original module loads 'likelihoods' from sample_data/likelihoods.pkl;
        # no data file is available in-script, so a placeholder is used.
        self.X_out = {"likelihoods": None}
        self._jpeg = jax.jit(lambda X: diff_jpeg(X, quality=quality))

    def __call__(self, X):
        self.X_out["x_hat"] = self._jpeg(X)
        return self.X_out


if __name__ == "__main__":
    key = jax.random.PRNGKey(0)
    B, C, H, W = 2, 3, 16, 16          # patch_sz = 16
    x = jax.random.uniform(key, (B, C, H, W), dtype=jnp.float32)

    codec = CodecJPEG(patch_sz=H, quality=80)
    out = codec(x)
    x_hat = jax.block_until_ready(out["x_hat"])

    assert x_hat.shape == (B, C, H, W)
    assert bool(jnp.all(jnp.isfinite(x_hat)))
    assert bool(jnp.all((x_hat >= 0.0) & (x_hat <= 1.0)))
    print("KERNEL_OK")
</pallas_src>

<mosaic_0001>
module attributes {stable_mosaic.version = 11 : i64} {
  func.func @_fwd_color_kernel(%arg0: i32, %arg1: i32, %arg2: memref<1x3x8x32xf32, #tpu.memory_space<vmem>>, %arg3: memref<32x8xf32, #tpu.memory_space<vmem>>, %arg4: memref<1x8x32xf32, #tpu.memory_space<vmem>>, %arg5: memref<2x1x8x8xf32, #tpu.memory_space<vmem>>) attributes {dimension_semantics = [#tpu.dimension_semantics<parallel>, #tpu.dimension_semantics<parallel>], iteration_bounds = array<i64: 2, 1>, scalar_prefetch = 0 : i64, scratch_operands = 0 : i64, tpu.core_type = #tpu.core_type<tc>, window_params = [{transform_indices = @transform_0, window_bounds = array<i64: 1, 3, 8, 32>}, {pipeline_mode = #tpu.pipeline_mode<synchronous>, transform_indices = @transform_1, window_bounds = array<i64: 32, 8>}, {transform_indices = @transform_2, window_bounds = array<i64: 1, 8, 32>}, {transform_indices = @transform_3, window_bounds = array<i64: 2, 1, 8, 8>}]} {
    %c0 = arith.constant 0 : index
    %c0_0 = arith.constant 0 : index
    %c0_1 = arith.constant 0 : index
    %c0_2 = arith.constant 0 : index
    %0 = vector.load %arg2[%c0, %c0_0, %c0_1, %c0_2] : memref<1x3x8x32xf32, #tpu.memory_space<vmem>>, vector<1x1x8x32xf32>
    %1 = vector.shape_cast %0 : vector<1x1x8x32xf32> to vector<8x32xf32>
    %cst = arith.constant 2.550000e+02 : f32
    %2 = vector.broadcast %cst : f32 to vector<8x32xf32>
    %3 = arith.mulf %1, %2 : vector<8x32xf32>
    %c0_3 = arith.constant 0 : index
    %c1 = arith.constant 1 : index
    %c0_4 = arith.constant 0 : index
    %c0_5 = arith.constant 0 : index
    %4 = vector.load %arg2[%c0_3, %c1, %c0_4, %c0_5] : memref<1x3x8x32xf32, #tpu.memory_space<vmem>>, vector<1x1x8x32xf32>
    %5 = vector.shape_cast %4 : vector<1x1x8x32xf32> to vector<8x32xf32>
    %cst_6 = arith.constant 2.550000e+02 : f32
    %6 = vector.broadcast %cst_6 : f32 to vector<8x32xf32>
    %7 = arith.mulf %5, %6 : vector<8x32xf32>
    %c0_7 = arith.constant 0 : index
    %c2 = arith.constant 2 : index
    %c0_8 = arith.constant 0 : index
    %c0_9 = arith.constant 0 : index
    %8 = vector.load %arg2[%c0_7, %c2, %c0_8, %c0_9] : memref<1x3x8x32xf32, #tpu.memory_space<vmem>>, vector<1x1x8x32xf32>
    %9 = vector.shape_cast %8 : vector<1x1x8x32xf32> to vector<8x32xf32>
    %cst_10 = arith.constant 2.550000e+02 : f32
    %10 = vector.broadcast %cst_10 : f32 to vector<8x32xf32>
    %11 = arith.mulf %9, %10 : vector<8x32xf32>
    %cst_11 = arith.constant 2.990000e-01 : f32
    %12 = vector.broadcast %cst_11 : f32 to vector<8x32xf32>
    %13 = arith.mulf %12, %3 : vector<8x32xf32>
    %cst_12 = arith.constant 5.870000e-01 : f32
    %14 = vector.broadcast %cst_12 : f32 to vector<8x32xf32>
    %15 = arith.mulf %14, %7 : vector<8x32xf32>
    %16 = arith.addf %13, %15 : vector<8x32xf32>
    %cst_13 = arith.constant 1.140000e-01 : f32
    %17 = vector.broadcast %cst_13 : f32 to vector<8x32xf32>
    %18 = arith.mulf %17, %11 : vector<8x32xf32>
    %19 = arith.addf %16, %18 : vector<8x32xf32>
    %c0_14 = arith.constant 0 : index
    %c0_15 = arith.constant 0 : index
    %c0_16 = arith.constant 0 : index
    %20 = vector.load %arg4[%c0_14, %c0_15, %c0_16] : memref<1x8x32xf32, #tpu.memory_space<vmem>>, vector<1x8x32xf32>
    %21 = vector.shape_cast %20 : vector<1x8x32xf32> to vector<8x32xf32>
    %22 = vector.shape_cast %19 : vector<8x32xf32> to vector<1x8x32xf32>
    tpu.vector_store %arg4[%c0_14, %c0_15, %c0_16], %22 {strides = array<i32>} : memref<1x8x32xf32, #tpu.memory_space<vmem>>, vector<1x8x32xf32>,
    %cst_17 = arith.constant -1.687360e-01 : f32
    %23 = vector.broadcast %cst_17 : f32 to vector<8x32xf32>
    %24 = arith.mulf %23, %3 : vector<8x32xf32>
    %cst_18 = arith.constant 3.312640e-01 : f32
    %25 = vector.broadcast %cst_18 : f32 to vector<8x32xf32>
    %26 = arith.mulf %25, %7 : vector<8x32xf32>
    %27 = arith.subf %24, %26 : vector<8x32xf32>
    %cst_19 = arith.constant 5.000000e-01 : f32
    %28 = vector.broadcast %cst_19 : f32 to vector<8x32xf32>
    %29 = arith.mulf %28, %11 : vector<8x32xf32>
    %30 = arith.addf %27, %29 : vector<8x32xf32>
    %cst_20 = arith.constant 1.280000e+02 : f32
    %31 = vector.broadcast %cst_20 : f32 to vector<8x32xf32>
    %32 = arith.addf %30, %31 : vector<8x32xf32>
    %cst_21 = arith.constant 5.000000e-01 : f32
    %33 = vector.broadcast %cst_21 : f32 to vector<8x32xf32>
    %34 = arith.mulf %33, %3 : vector<8x32xf32>
    %cst_22 = arith.constant 4.186880e-01 : f32
    %35 = vector.broadcast %cst_22 : f32 to vector<8x32xf32>
    %36 = arith.mulf %35, %7 : vector<8x32xf32>
    %37 = arith.subf %34, %36 : vector<8x32xf32>
    %cst_23 = arith.constant 8.131200e-02 : f32
    %38 = vector.broadcast %cst_23 : f32 to vector<8x32xf32>
    %39 = arith.mulf %38, %11 : vector<8x32xf32>
    %40 = arith.subf %37, %39 : vector<8x32xf32>
    %cst_24 = arith.constant 1.280000e+02 : f32
    %41 = vector.broadcast %cst_24 : f32 to vector<8x32xf32>
    %42 = arith.addf %40, %41 : vector<8x32xf32>
    %c0_25 = arith.constant 0 : index
    %c0_26 = arith.constant 0 : index
    %43 = vector.load %arg3[%c0_25, %c0_26] : memref<32x8xf32, #tpu.memory_space<vmem>>, vector<32x8xf32>
    %cst_27 = arith.constant dense<0.000000e+00> : vector<8x8xf32>
    %44 = tpu.matmul %32, %43, %cst_27 {dimension_numbers = #tpu.dot_dimension_numbers<[1], [0], [0], [1], [0, 0, 1, 1], [], []>} : vector<8x32xf32>, vector<32x8xf32>, vector<8x8xf32> -> vector<8x8xf32>
    %c0_28 = arith.constant 0 : index
    %c0_29 = arith.constant 0 : index
    %c0_30 = arith.constant 0 : index
    %c0_31 = arith.constant 0 : index
    %45 = vector.load %arg5[%c0_28, %c0_29, %c0_30, %c0_31] : memref<2x1x8x8xf32, #tpu.memory_space<vmem>>, vector<1x1x8x8xf32>
    %46 = vector.shape_cast %45 : vector<1x1x8x8xf32> to vector<8x8xf32>
    %47 = vector.shape_cast %44 : vector<8x8xf32> to vector<1x1x8x8xf32>
    tpu.vector_store %arg5[%c0_28, %c0_29, %c0_30, %c0_31], %47 {strides = array<i32>} : memref<2x1x8x8xf32, #tpu.memory_space<vmem>>, vector<1x1x8x8xf32>,
    %cst_32 = arith.constant dense<0.000000e+00> : vector<8x8xf32>
    %48 = tpu.matmul %42, %43, %cst_32 {dimension_numbers = #tpu.dot_dimension_numbers<[1], [0], [0], [1], [0, 0, 1, 1], [], []>} : vector<8x32xf32>, vector<32x8xf32>, vector<8x8xf32> -> vector<8x8xf32>
    %c1_33 = arith.constant 1 : index
    %c0_34 = arith.constant 0 : index
    %c0_35 = arith.constant 0 : index
    %c0_36 = arith.constant 0 : index
    %49 = vector.load %arg5[%c1_33, %c0_34, %c0_35, %c0_36] : memref<2x1x8x8xf32, #tpu.memory_space<vmem>>, vector<1x1x8x8xf32>
    %50 = vector.shape_cast %49 : vector<1x1x8x8xf32> to vector<8x8xf32>
    %51 = vector.shape_cast %48 : vector<8x8xf32> to vector<1x1x8x8xf32>
    tpu.vector_store %arg5[%c1_33, %c0_34, %c0_35, %c0_36], %51 {strides = array<i32>} : memref<2x1x8x8xf32, #tpu.memory_space<vmem>>, vector<1x1x8x8xf32>,
    return
  }
  func.func @transform_0(%arg0: i32, %arg1: i32) -> (i32, i32, i32, i32) {
    %c0_i32 = arith.constant 0 : i32
    %c0_i32_0 = arith.constant 0 : i32
    %c0_i32_1 = arith.constant 0 : i32
    return %arg0, %c0_i32, %arg1, %c0_i32_0 : i32, i32, i32, i32
  }
  func.func @transform_1(%arg0: i32, %arg1: i32) -> (i32, i32) {
    %c0_i32 = arith.constant 0 : i32
    %c0_i32_0 = arith.constant 0 : i32
    %c0_i32_1 = arith.constant 0 : i32
    return %c0_i32, %c0_i32_0 : i32, i32
  }
  func.func @transform_2(%arg0: i32, %arg1: i32) -> (i32, i32, i32) {
    %c0_i32 = arith.constant 0 : i32
    %c0_i32_0 = arith.constant 0 : i32
    return %arg0, %arg1, %c0_i32 : i32, i32, i32
  }
  func.func @transform_3(%arg0: i32, %arg1: i32) -> (i32, i32, i32, i32) {
    %c0_i32 = arith.constant 0 : i32
    %c0_i32_0 = arith.constant 0 : i32
    %c0_i32_1 = arith.constant 0 : i32
    return %c0_i32, %arg0, %arg1, %c0_i32_0 : i32, i32, i32, i32
  }
}

module attributes {stable_mosaic.version = 11 : i64} {
  func.func @_jpeg_block_kernel(%arg0: i32, %arg1: memref<1x256xbf16, #tpu.memory_space<vmem>>, %arg2: memref<256x256xbf16, #tpu.memory_space<vmem>>, %arg3: memref<256x256xbf16, #tpu.memory_space<vmem>>, %arg4: memref<1x256xf32, #tpu.memory_space<vmem>>) attributes {dimension_semantics = [#tpu.dimension_semantics<parallel>], iteration_bounds = array<i64: 1>, scalar_prefetch = 0 : i64, scratch_operands = 0 : i64, tpu.core_type = #tpu.core_type<tc>, window_params = [{transform_indices = @transform_0, window_bounds = array<i64: 1, 256>}, {pipeline_mode = #tpu.pipeline_mode<synchronous>, transform_indices = @transform_1, window_bounds = array<i64: 256, 256>}, {pipeline_mode = #tpu.pipeline_mode<synchronous>, transform_indices = @transform_2, window_bounds = array<i64: 256, 256>}, {transform_indices = @transform_3, window_bounds = array<i64: 1, 256>}]} {
    %c0 = arith.constant 0 : index
    %c0_0 = arith.constant 0 : index
    %0 = vector.load %arg1[%c0, %c0_0] : memref<1x256xbf16, #tpu.memory_space<vmem>>, vector<1x256xbf16>
    %cst = arith.constant 1.280000e+02 : bf16
    %1 = vector.broadcast %cst : bf16 to vector<1x256xbf16>
    %2 = arith.subf %0, %1 : vector<1x256xbf16>
    %c0_1 = arith.constant 0 : index
    %c0_2 = arith.constant 0 : index
    %3 = vector.load %arg2[%c0_1, %c0_2] : memref<256x256xbf16, #tpu.memory_space<vmem>>, vector<256x256xbf16>
    %cst_3 = arith.constant dense<0.000000e+00> : vector<1x256xf32>
    %4 = tpu.matmul %2, %3, %cst_3 {dimension_numbers = #tpu.dot_dimension_numbers<[1], [0], [0], [1], [0, 0, 1, 1], [], []>} : vector<1x256xbf16>, vector<256x256xbf16>, vector<1x256xf32> -> vector<1x256xf32>
    %5 = math.roundeven %4 : vector<1x256xf32>
    %6 = arith.subf %4, %5 : vector<1x256xf32>
    %7 = arith.mulf %6, %6 : vector<1x256xf32>
    %8 = arith.mulf %6, %7 : vector<1x256xf32>
    %9 = arith.addf %5, %8 : vector<1x256xf32>
    %10 = arith.truncf %9 : vector<1x256xf32> to vector<1x256xbf16>
    %c0_4 = arith.constant 0 : index
    %c0_5 = arith.constant 0 : index
    %11 = vector.load %arg3[%c0_4, %c0_5] : memref<256x256xbf16, #tpu.memory_space<vmem>>, vector<256x256xbf16>
    %cst_6 = arith.constant dense<0.000000e+00> : vector<1x256xf32>
    %12 = tpu.matmul %10, %11, %cst_6 {dimension_numbers = #tpu.dot_dimension_numbers<[1], [0], [0], [1], [0, 0, 1, 1], [], []>} : vector<1x256xbf16>, vector<256x256xbf16>, vector<1x256xf32> -> vector<1x256xf32>
    %cst_7 = arith.constant 1.280000e+02 : f32
    %13 = vector.broadcast %cst_7 : f32 to vector<1x256xf32>
    %14 = arith.addf %12, %13 : vector<1x256xf32>
    %c0_8 = arith.constant 0 : index
    %c0_9 = arith.constant 0 : index
    %15 = vector.load %arg4[%c0_8, %c0_9] : memref<1x256xf32, #tpu.memory_space<vmem>>, vector<1x256xf32>
    tpu.vector_store %arg4[%c0_8, %c0_9], %14 {strides = array<i32>} : memref<1x256xf32, #tpu.memory_space<vmem>>, vector<1x256xf32>,
    return
  }
  func.func @transform_0(%arg0: i32) -> (i32, i32) {
    %c0_i32 = arith.constant 0 : i32
    %c0_i32_0 = arith.constant 0 : i32
    return %arg0, %c0_i32 : i32, i32
  }
  func.func @transform_1(%arg0: i32) -> (i32, i32) {
    %c0_i32 = arith.constant 0 : i32
    %c0_i32_0 = arith.constant 0 : i32
    %c0_i32_1 = arith.constant 0 : i32
    return %c0_i32, %c0_i32_0 : i32, i32
  }
  func.func @transform_2(%arg0: i32) -> (i32, i32) {
    %c0_i32 = arith.constant 0 : i32
    %c0_i32_0 = arith.constant 0 : i32
    %c0_i32_1 = arith.constant 0 : i32
    return %c0_i32, %c0_i32_0 : i32, i32
  }
  func.func @transform_3(%arg0: i32) -> (i32, i32) {
    %c0_i32 = arith.constant 0 : i32
    %c0_i32_0 = arith.constant 0 : i32
    return %arg0, %c0_i32 : i32, i32
  }
}

module attributes {stable_mosaic.version = 11 : i64} {
  func.func @_jpeg_block_kernel(%arg0: i32, %arg1: memref<2x256xbf16, #tpu.memory_space<vmem>>, %arg2: memref<256x256xbf16, #tpu.memory_space<vmem>>, %arg3: memref<256x256xbf16, #tpu.memory_space<vmem>>, %arg4: memref<2x256xf32, #tpu.memory_space<vmem>>) attributes {dimension_semantics = [#tpu.dimension_semantics<parallel>], iteration_bounds = array<i64: 1>, scalar_prefetch = 0 : i64, scratch_operands = 0 : i64, tpu.core_type = #tpu.core_type<tc>, window_params = [{transform_indices = @transform_0, window_bounds = array<i64: 2, 256>}, {pipeline_mode = #tpu.pipeline_mode<synchronous>, transform_indices = @transform_1, window_bounds = array<i64: 256, 256>}, {pipeline_mode = #tpu.pipeline_mode<synchronous>, transform_indices = @transform_2, window_bounds = array<i64: 256, 256>}, {transform_indices = @transform_3, window_bounds = array<i64: 2, 256>}]} {
    %c0 = arith.constant 0 : index
    %c0_0 = arith.constant 0 : index
    %0 = vector.load %arg1[%c0, %c0_0] : memref<2x256xbf16, #tpu.memory_space<vmem>>, vector<2x256xbf16>
    %cst = arith.constant 1.280000e+02 : bf16
    %1 = vector.broadcast %cst : bf16 to vector<2x256xbf16>
    %2 = arith.subf %0, %1 : vector<2x256xbf16>
    %c0_1 = arith.constant 0 : index
    %c0_2 = arith.constant 0 : index
    %3 = vector.load %arg2[%c0_1, %c0_2] : memref<256x256xbf16, #tpu.memory_space<vmem>>, vector<256x256xbf16>
    %cst_3 = arith.constant dense<0.000000e+00> : vector<2x256xf32>
    %4 = tpu.matmul %2, %3, %cst_3 {dimension_numbers = #tpu.dot_dimension_numbers<[1], [0], [0], [1], [0, 0, 1, 1], [], []>} : vector<2x256xbf16>, vector<256x256xbf16>, vector<2x256xf32> -> vector<2x256xf32>
    %5 = math.roundeven %4 : vector<2x256xf32>
    %6 = arith.subf %4, %5 : vector<2x256xf32>
    %7 = arith.mulf %6, %6 : vector<2x256xf32>
    %8 = arith.mulf %6, %7 : vector<2x256xf32>
    %9 = arith.addf %5, %8 : vector<2x256xf32>
    %10 = arith.truncf %9 : vector<2x256xf32> to vector<2x256xbf16>
    %c0_4 = arith.constant 0 : index
    %c0_5 = arith.constant 0 : index
    %11 = vector.load %arg3[%c0_4, %c0_5] : memref<256x256xbf16, #tpu.memory_space<vmem>>, vector<256x256xbf16>
    %cst_6 = arith.constant dense<0.000000e+00> : vector<2x256xf32>
    %12 = tpu.matmul %10, %11, %cst_6 {dimension_numbers = #tpu.dot_dimension_numbers<[1], [0], [0], [1], [0, 0, 1, 1], [], []>} : vector<2x256xbf16>, vector<256x256xbf16>, vector<2x256xf32> -> vector<2x256xf32>
    %cst_7 = arith.constant 1.280000e+02 : f32
    %13 = vector.broadcast %cst_7 : f32 to vector<2x256xf32>
    %14 = arith.addf %12, %13 : vector<2x256xf32>
    %c0_8 = arith.constant 0 : index
    %c0_9 = arith.constant 0 : index
    %15 = vector.load %arg4[%c0_8, %c0_9] : memref<2x256xf32, #tpu.memory_space<vmem>>, vector<2x256xf32>
    tpu.vector_store %arg4[%c0_8, %c0_9], %14 {strides = array<i32>} : memref<2x256xf32, #tpu.memory_space<vmem>>, vector<2x256xf32>,
    return
  }
  func.func @transform_0(%arg0: i32) -> (i32, i32) {
    %c0_i32 = arith.constant 0 : i32
    %c0_i32_0 = arith.constant 0 : i32
    return %arg0, %c0_i32 : i32, i32
  }
  func.func @transform_1(%arg0: i32) -> (i32, i32) {
    %c0_i32 = arith.constant 0 : i32
    %c0_i32_0 = arith.constant 0 : i32
    %c0_i32_1 = arith.constant 0 : i32
    return %c0_i32, %c0_i32_0 : i32, i32
  }
  func.func @transform_2(%arg0: i32) -> (i32, i32) {
    %c0_i32 = arith.constant 0 : i32
    %c0_i32_0 = arith.constant 0 : i32
    %c0_i32_1 = arith.constant 0 : i32
    return %c0_i32, %c0_i32_0 : i32, i32
  }
  func.func @transform_3(%arg0: i32) -> (i32, i32) {
    %c0_i32 = arith.constant 0 : i32
    %c0_i32_0 = arith.constant 0 : i32
    return %arg0, %c0_i32 : i32, i32
  }
}

module attributes {stable_mosaic.version = 11 : i64} {
  func.func @_inv_color_kernel(%arg0: i32, %arg1: i32, %arg2: memref<1x8x32xf32, #tpu.memory_space<vmem>>, %arg3: memref<2x1x8x8xf32, #tpu.memory_space<vmem>>, %arg4: memref<8x32xf32, #tpu.memory_space<vmem>>, %arg5: memref<1x3x8x32xf32, #tpu.memory_space<vmem>>) attributes {dimension_semantics = [#tpu.dimension_semantics<parallel>, #tpu.dimension_semantics<parallel>], iteration_bounds = array<i64: 2, 1>, scalar_prefetch = 0 : i64, scratch_operands = 0 : i64, tpu.core_type = #tpu.core_type<tc>, window_params = [{transform_indices = @transform_0, window_bounds = array<i64: 1, 8, 32>}, {transform_indices = @transform_1, window_bounds = array<i64: 2, 1, 8, 8>}, {pipeline_mode = #tpu.pipeline_mode<synchronous>, transform_indices = @transform_2, window_bounds = array<i64: 8, 32>}, {transform_indices = @transform_3, window_bounds = array<i64: 1, 3, 8, 32>}]} {
    %c0 = arith.constant 0 : index
    %c0_0 = arith.constant 0 : index
    %c0_1 = arith.constant 0 : index
    %0 = vector.load %arg2[%c0, %c0_0, %c0_1] : memref<1x8x32xf32, #tpu.memory_space<vmem>>, vector<1x8x32xf32>
    %1 = vector.shape_cast %0 : vector<1x8x32xf32> to vector<8x32xf32>
    %c0_2 = arith.constant 0 : index
    %c0_3 = arith.constant 0 : index
    %2 = vector.load %arg4[%c0_2, %c0_3] : memref<8x32xf32, #tpu.memory_space<vmem>>, vector<8x32xf32>
    %c0_4 = arith.constant 0 : index
    %c0_5 = arith.constant 0 : index
    %c0_6 = arith.constant 0 : index
    %c0_7 = arith.constant 0 : index
    %3 = vector.load %arg3[%c0_4, %c0_5, %c0_6, %c0_7] : memref<2x1x8x8xf32, #tpu.memory_space<vmem>>, vector<1x1x8x8xf32>
    %4 = vector.shape_cast %3 : vector<1x1x8x8xf32> to vector<8x8xf32>
    %cst = arith.constant dense<0.000000e+00> : vector<8x32xf32>
    %5 = tpu.matmul %4, %2, %cst {dimension_numbers = #tpu.dot_dimension_numbers<[1], [0], [0], [1], [0, 0, 1, 1], [], []>} : vector<8x8xf32>, vector<8x32xf32>, vector<8x32xf32> -> vector<8x32xf32>
    %cst_8 = arith.constant 1.280000e+02 : f32
    %6 = vector.broadcast %cst_8 : f32 to vector<8x32xf32>
    %7 = arith.subf %5, %6 : vector<8x32xf32>
    %c1 = arith.constant 1 : index
    %c0_9 = arith.constant 0 : index
    %c0_10 = arith.constant 0 : index
    %c0_11 = arith.constant 0 : index
    %8 = vector.load %arg3[%c1, %c0_9, %c0_10, %c0_11] : memref<2x1x8x8xf32, #tpu.memory_space<vmem>>, vector<1x1x8x8xf32>
    %9 = vector.shape_cast %8 : vector<1x1x8x8xf32> to vector<8x8xf32>
    %cst_12 = arith.constant dense<0.000000e+00> : vector<8x32xf32>
    %10 = tpu.matmul %9, %2, %cst_12 {dimension_numbers = #tpu.dot_dimension_numbers<[1], [0], [0], [1], [0, 0, 1, 1], [], []>} : vector<8x8xf32>, vector<8x32xf32>, vector<8x32xf32> -> vector<8x32xf32>
    %cst_13 = arith.constant 1.280000e+02 : f32
    %11 = vector.broadcast %cst_13 : f32 to vector<8x32xf32>
    %12 = arith.subf %10, %11 : vector<8x32xf32>
    %cst_14 = arith.constant 1.402000e+00 : f32
    %13 = vector.broadcast %cst_14 : f32 to vector<8x32xf32>
    %14 = arith.mulf %13, %12 : vector<8x32xf32>
    %15 = arith.addf %1, %14 : vector<8x32xf32>
    %cst_15 = arith.constant 0.000000e+00 : f32
    %cst_16 = arith.constant 2.550000e+02 : f32
    %16 = vector.broadcast %cst_15 : f32 to vector<8x32xf32>
    %17 = arith.maximumf %16, %15 : vector<8x32xf32>
    %18 = vector.broadcast %cst_16 : f32 to vector<8x32xf32>
    %19 = arith.minimumf %18, %17 : vector<8x32xf32>
    %cst_17 = arith.constant 0.00392156886 : f32
    %20 = vector.broadcast %cst_17 : f32 to vector<8x32xf32>
    %21 = arith.mulf %19, %20 : vector<8x32xf32>
    %c0_18 = arith.constant 0 : index
    %c0_19 = arith.constant 0 : index
    %c0_20 = arith.constant 0 : index
    %c0_21 = arith.constant 0 : index
    %22 = vector.load %arg5[%c0_18, %c0_19, %c0_20, %c0_21] : memref<1x3x8x32xf32, #tpu.memory_space<vmem>>, vector<1x1x8x32xf32>
    %23 = vector.shape_cast %22 : vector<1x1x8x32xf32> to vector<8x32xf32>
    %24 = vector.shape_cast %21 : vector<8x32xf32> to vector<1x1x8x32xf32>
    tpu.vector_store %arg5[%c0_18, %c0_19, %c0_20, %c0_21], %24 {strides = array<i32>} : memref<1x3x8x32xf32, #tpu.memory_space<vmem>>, vector<1x1x8x32xf32>,
    %cst_22 = arith.constant 3.441360e-01 : f32
    %25 = vector.broadcast %cst_22 : f32 to vector<8x32xf32>
    %26 = arith.mulf %25, %7 : vector<8x32xf32>
    %27 = arith.subf %1, %26 : vector<8x32xf32>
    %cst_23 = arith.constant 7.141360e-01 : f32
    %28 = vector.broadcast %cst_23 : f32 to vector<8x32xf32>
    %29 = arith.mulf %28, %12 : vector<8x32xf32>
    %30 = arith.subf %27, %29 : vector<8x32xf32>
    %cst_24 = arith.constant 0.000000e+00 : f32
    %cst_25 = arith.constant 2.550000e+02 : f32
    %31 = vector.broadcast %cst_24 : f32 to vector<8x32xf32>
    %32 = arith.maximumf %31, %30 : vector<8x32xf32>
    %33 = vector.broadcast %cst_25 : f32 to vector<8x32xf32>
    %34 = arith.minimumf %33, %32 : vector<8x32xf32>
    %cst_26 = arith.constant 0.00392156886 : f32
    %35 = vector.broadcast %cst_26 : f32 to vector<8x32xf32>
    %36 = arith.mulf %34, %35 : vector<8x32xf32>
    %c0_27 = arith.constant 0 : index
    %c1_28 = arith.constant 1 : index
    %c0_29 = arith.constant 0 : index
    %c0_30 = arith.constant 0 : index
    %37 = vector.load %arg5[%c0_27, %c1_28, %c0_29, %c0_30] : memref<1x3x8x32xf32, #tpu.memory_space<vmem>>, vector<1x1x8x32xf32>
    %38 = vector.shape_cast %37 : vector<1x1x8x32xf32> to vector<8x32xf32>
    %39 = vector.shape_cast %36 : vector<8x32xf32> to vector<1x1x8x32xf32>
    tpu.vector_store %arg5[%c0_27, %c1_28, %c0_29, %c0_30], %39 {strides = array<i32>} : memref<1x3x8x32xf32, #tpu.memory_space<vmem>>, vector<1x1x8x32xf32>,
    %cst_31 = arith.constant 1.772000e+00 : f32
    %40 = vector.broadcast %cst_31 : f32 to vector<8x32xf32>
    %41 = arith.mulf %40, %7 : vector<8x32xf32>
    %42 = arith.addf %1, %41 : vector<8x32xf32>
    %cst_32 = arith.constant 0.000000e+00 : f32
    %cst_33 = arith.constant 2.550000e+02 : f32
    %43 = vector.broadcast %cst_32 : f32 to vector<8x32xf32>
    %44 = arith.maximumf %43, %42 : vector<8x32xf32>
    %45 = vector.broadcast %cst_33 : f32 to vector<8x32xf32>
    %46 = arith.minimumf %45, %44 : vector<8x32xf32>
    %cst_34 = arith.constant 0.00392156886 : f32
    %47 = vector.broadcast %cst_34 : f32 to vector<8x32xf32>
    %48 = arith.mulf %46, %47 : vector<8x32xf32>
    %c0_35 = arith.constant 0 : index
    %c2 = arith.constant 2 : index
    %c0_36 = arith.constant 0 : index
    %c0_37 = arith.constant 0 : index
    %49 = vector.load %arg5[%c0_35, %c2, %c0_36, %c0_37] : memref<1x3x8x32xf32, #tpu.memory_space<vmem>>, vector<1x1x8x32xf32>
    %50 = vector.shape_cast %49 : vector<1x1x8x32xf32> to vector<8x32xf32>
    %51 = vector.shape_cast %48 : vector<8x32xf32> to vector<1x1x8x32xf32>
    tpu.vector_store %arg5[%c0_35, %c2, %c0_36, %c0_37], %51 {strides = array<i32>} : memref<1x3x8x32xf32, #tpu.memory_space<vmem>>, vector<1x1x8x32xf32>,
    return
  }
  func.func @transform_0(%arg0: i32, %arg1: i32) -> (i32, i32, i32) {
    %c0_i32 = arith.constant 0 : i32
    %c0_i32_0 = arith.constant 0 : i32
    return %arg0, %arg1, %c0_i32 : i32, i32, i32
  }
  func.func @transform_1(%arg0: i32, %arg1: i32) -> (i32, i32, i32, i32) {
    %c0_i32 = arith.constant 0 : i32
    %c0_i32_0 = arith.constant 0 : i32
    %c0_i32_1 = arith.constant 0 : i32
    return %c0_i32, %arg0, %arg1, %c0_i32_0 : i32, i32, i32, i32
  }
  func.func @transform_2(%arg0: i32, %arg1: i32) -> (i32, i32) {
    %c0_i32 = arith.constant 0 : i32
    %c0_i32_0 = arith.constant 0 : i32
    %c0_i32_1 = arith.constant 0 : i32
    return %c0_i32, %c0_i32_0 : i32, i32
  }
  func.func @transform_3(%arg0: i32, %arg1: i32) -> (i32, i32, i32, i32) {
    %c0_i32 = arith.constant 0 : i32
    %c0_i32_0 = arith.constant 0 : i32
    %c0_i32_1 = arith.constant 0 : i32
    return %arg0, %c0_i32, %arg1, %c0_i32_0 : i32, i32, i32, i32
  }
}

</mosaic_0001>

<llo_original>
// kernel: _lambda_.4
$region0: #{_lambda_.4}
  #allocation0 [shape = 'u32[]', space=smem, size = 0x4, offset = 0x4, fixed_abs, tag = 'smem constant byte address 0x4 - core index']
  #allocation1 [shape = 'u32[144,128]{1,0:T(1,128)}', space=vmem, size = 0x12000, scoped, tag = 'internal scratch']
  %s0 = inlined_call_operand.vmem [shape: f32[2,3,8,32], index: 0, kind: input, shape index: {}]
  %s1 = inlined_call_operand.vmem [shape: f32[32,8], index: 1, kind: input, shape index: {}]
  %s2 = inlined_call_operand.vmem [shape: f32[2,8,32], index: 2, kind: output, shape index: {0}]
  %s3 = inlined_call_operand.vmem [shape: f32[2,2,8,8], index: 3, kind: output, shape index: {1}]
  %4 = xla_tuple %s2, %s3
  %s5 = sld [smem:[#allocation0]]
  $region83: #{_lambda_.4} parent=0
    _
  %s7 = ssub.s32 1, %s5
  %s8 = scalar_select 0, %s7, %s5
  $region1: #{_lambda_.4} parent=0
    #allocation2 [shape = 'u8[16384]{0}', space=vmem, size = 0x4000, scoped, tag = 'output window, operand 1']
    loop: start=0, step=1, limit=4
    $region2: #{_lambda_.4} parent=1 // loop_pre_header
      _
    $region3: #{_lambda_.4} parent=1 // loop_header
      %s10 = sphi 0, %s14
      %p11 = scmp.ge.s32.totalorder %s10, 4
      %s17 = sphi 0, %s29
      %s18 = sphi 0, %s25
      %s19 = sphi 0, %s17
      %s20 = sphi 0, %s18
      %s21 = sphi 0, %s19
      %s22 = sphi 0, %s20
      %s34 = sphi 0, %s36
      %s37 = sphi 0, %s34
      %s38 = sphi 0, %s37
      %s54 = sphi 0, %s38
      %s58 = sphi 0, %s58
      %s60 = sphi 0, %s58
      %s61 = sphi 0, %s60
      %s75 = sphi 0, %s61
      %s83 = sphi 0, %s85
      %s86 = sphi 0, %s83
      %s87 = sphi 0, %s86
      %s103 = sphi 0, %s87
      %s111 = sphi 0, %s113
      %s114 = sphi 0, %s111
      %s115 = sphi 0, %s114
      %s131 = sphi 0, %s115
    $region4: #{_lambda_.4} parent=1 // loop_header_branch
      %13 = sbr.rel (%p11) target = $region8
    $region5: #{_lambda_.4} parent=1 // loop_body
      %s15 = ssub.s32 %s10, 1
      %s16 = ssub.s32 %s10, 2
      %s23 = sadd.s32 1, %s18
      %p24 = scmp.ge.s32.totalorder %s23, 1
      %s25 = scalar_select %p24, 0, %s23
      %s26 = sadd.s32 1, %s17
      %s27 = scalar_select %p24, %s26, %s17
      %p28 = scmp.ge.s32.totalorder %s27, 2
      %s29 = scalar_select %p28, 0, %s27
      %s30 = ssub.s32 %s17, %s29
      %s31 = ssub.s32 %s18, %s25
      %s32 = sor.u32 %s30, %s31
      %p33 = scmp.eq.s32.totalorder %s32, 0
      %s35 = sadd.s32 %s34, 1
      %s36 = scalar_select %p33, %s34, %s35
      %p39 = pneg %p33
      %p40 = scmp.eq.s32.totalorder %s10, 1
      %p41 = por %p39, %p40
      %p42 = scmp.ne.s32.totalorder %s34, %s37
      %p43 = scmp.eq.s32.totalorder %s10, 0
      %p44 = por %p42, %p43
      %p45 = scmp.ne.s32.totalorder %s34, %s37
      %p46 = scmp.eq.s32.totalorder %s15, 1
      %p47 = por %p45, %p46
      %p48 = scmp.ne.s32.totalorder %s37, %s38
      %p49 = scmp.eq.s32.totalorder %s15, 0
      %p50 = por %p48, %p49
      %p51 = scmp.ne.s32.totalorder %s37, %s38
      %p52 = scmp.eq.s32.totalorder %s16, 1
      %p53 = por %p51, %p52
      %p55 = scmp.ne.s32.totalorder %s38, %s54
      %p56 = scmp.eq.s32.totalorder %s16, 0
      %p57 = por %p55, %p56
      %s59 = sadd.s32 %s58, 1
      %p62 = scmp.eq.s32.totalorder %s10, 1
      %p63 = scmp.ne.s32.totalorder %s58, %s60
      %p64 = scmp.eq.s32.totalorder %s10, 0
      %p65 = por %p63, %p64
      %p66 = scmp.ne.s32.totalorder %s58, %s60
      %p67 = scmp.eq.s32.totalorder %s15, 1
      %p68 = por %p66, %p67
      %p69 = scmp.ne.s32.totalorder %s60, %s61
      %p70 = scmp.eq.s32.totalorder %s15, 0
      %p71 = por %p69, %p70
      %p72 = scmp.ne.s32.totalorder %s60, %s61
      %p73 = scmp.eq.s32.totalorder %s16, 1
      %p74 = por %p72, %p73
      %p76 = scmp.ne.s32.totalorder %s61, %s75
      %p77 = scmp.eq.s32.totalorder %s16, 0
      %p78 = por %p76, %p77
      %s79 = ssub.s32 %s17, %s29
      %s80 = ssub.s32 %s18, %s25
      %s81 = sor.u32 %s79, %s80
      %p82 = scmp.eq.s32.totalorder %s81, 0
      %s84 = sadd.s32 %s83, 1
      %s85 = scalar_select %p82, %s83, %s84
      %p88 = pneg %p82
      %p89 = scmp.eq.s32.totalorder %s10, 1
      %p90 = por %p88, %p89
      %p91 = scmp.ne.s32.totalorder %s83, %s86
      %p92 = scmp.eq.s32.totalorder %s10, 0
      %p93 = por %p91, %p92
      %p94 = scmp.ne.s32.totalorder %s83, %s86
      %p95 = scmp.eq.s32.totalorder %s15, 1
      %p96 = por %p94, %p95
      %p97 = scmp.ne.s32.totalorder %s86, %s87
      %p98 = scmp.eq.s32.totalorder %s15, 0
      %p99 = por %p97, %p98
      %p100 = scmp.ne.s32.totalorder %s86, %s87
      %p101 = scmp.eq.s32.totalorder %s16, 1
      %p102 = por %p100, %p101
      %p104 = scmp.ne.s32.totalorder %s87, %s103
      %p105 = scmp.eq.s32.totalorder %s16, 0
      %p106 = por %p104, %p105
      %s107 = ssub.s32 %s17, %s29
      %s108 = ssub.s32 %s18, %s25
      %s109 = sor.u32 %s107, %s108
      %p110 = scmp.eq.s32.totalorder %s109, 0
      %s112 = sadd.s32 %s111, 1
      %s113 = scalar_select %p110, %s111, %s112
      %p116 = pneg %p110
      %p117 = scmp.eq.s32.totalorder %s10, 1
      %p118 = por %p116, %p117
      %p119 = scmp.ne.s32.totalorder %s111, %s114
      %p120 = scmp.eq.s32.totalorder %s10, 0
      %p121 = por %p119, %p120
      %p122 = scmp.ne.s32.totalorder %s111, %s114
      %p123 = scmp.eq.s32.totalorder %s15, 1
      %p124 = por %p122, %p123
      %p125 = scmp.ne.s32.totalorder %s114, %s115
      %p126 = scmp.eq.s32.totalorder %s15, 0
      %p127 = por %p125, %p126
      %p128 = scmp.ne.s32.totalorder %s114, %s115
      %p129 = scmp.eq.s32.totalorder %s16, 1
      %p130 = por %p128, %p129
      %p132 = scmp.ne.s32.totalorder %s115, %s131
      %p133 = scmp.eq.s32.totalorder %s16, 0
      %p134 = por %p132, %p133
      %p135 = scmp.le.s32.totalorder 1, %s10
      %p136 = scmp.lt.s32.totalorder %s10, 3
      %p137 = pnand %p135, %p136
      %p138 = pneg %p137
      // Predicated region
      $region9: #{_lambda_.4} parent=5 // pred_check
        _
      $region10: #{_lambda_.4} parent=5 // pred_check_branch
        %140 = sbr.rel (%p137) target = $region12
      $region11: #{_lambda_.4} parent=5 // pred_region
        %s141 = ssub.s32 %s10, 1
        // Predicated region
        $region13: #{_lambda_.4} parent=11 // pred_check
          %p142 = pneg %p71
        $region14: #{_lambda_.4} parent=11 // pred_check_branch
          %144 = sbr.rel (%p142) target = $region16
        $region15: #{_lambda_.4} parent=11 // pred_region
          _
        $region16: #{_lambda_.4} parent=11 // pred_fallthru
          _
      $region12: #{_lambda_.4} parent=5 // pred_fallthru
        _
      %p145 = scmp.lt.s32.totalorder %s10, 2
      // Predicated region
      $region17: #{_lambda_.4} parent=5 // pred_check
        %p146 = pneg %p145
      $region18: #{_lambda_.4} parent=5 // pred_check_branch
        %148 = sbr.rel (%p146) target = $region20
      $region19: #{_lambda_.4} parent=5 // pred_region
        // Predicated region
        $region21: #{_lambda_.4} parent=19 // pred_check
          %p149 = pneg %p44
        $region22: #{_lambda_.4} parent=19 // pred_check_branch
          %151 = sbr.rel (%p149) target = $region24
        $region23: #{_lambda_.4} parent=19 // pred_region
          %p152 = scmp.lt.s32.totalorder %s17, 1
          %s153 = scalar_select %p152, %s17, 1
          %p154 = scmp.lt.s32.totalorder %s18, 0
          %s155 = scalar_select %p154, %s18, 0
          %s156 = smul.addr %s153, 3
          %s157 = sadd.s32 %s155, %s156
          %s158 = smul.addr %s157, 8
          %s159 = scalar_lea.vmem %s0, %s158
        $region24: #{_lambda_.4} parent=19 // pred_fallthru
          _
      $region20: #{_lambda_.4} parent=5 // pred_fallthru
        _
      %p160 = scmp.le.s32.totalorder 1, %s10
      %p161 = scmp.lt.s32.totalorder %s10, 3
      %p162 = pnand %p160, %p161
      %p163 = pneg %p162
      // Predicated region
      $region25: #{_lambda_.4} parent=5 // pred_check
        _
      $region26: #{_lambda_.4} parent=5 // pred_check_branch
        %165 = sbr.rel (%p162) target = $region28
      $region27: #{_lambda_.4} parent=5 // pred_region
        %s166 = ssub.s32 %s10, 1
        %p167 = scmp.lt.s32.totalorder %s19, 1
        %s168 = scalar_select %p167, %s19, 1
        %p169 = scmp.lt.s32.totalorder %s20, 0
        %s170 = scalar_select %p169, %s20, 0
        %s171 = smul.addr %s168, 3
        %s172 = sadd.s32 %s170, %s171
        %s173 = smul.addr %s172, 8
        %s174 = scalar_lea.vmem %s0, %s173
        %p175 = pneg %p50
        %p176 = pneg %p47
        %p177 = pneg %p71
        %p178 = pneg %p68
        %p179 = pneg %p99
        %p180 = pneg %p96
        %p181 = scmp.lt.s32.totalorder %s19, 1
        %s182 = scalar_select %p181, %s19, 1
        %p183 = scmp.lt.s32.totalorder %s20, 0
        %s184 = scalar_select %p183, %s20, 0
        %s185 = sadd.s32 %s184, %s182
        %s186 = smul.addr %s185, 8
        %s187 = scalar_lea.vmem %s2, %s186
        %p188 = pneg %p127
        %p189 = pneg %p124
        %s190 = sand.u32 %s114, 1
        %s191 = sand.u32 %s114, 1
        %s192 = smul.addr %s191, 16
        %s193 = scalar_lea.vmem [#allocation2], %s192
        %p194 = scmp.lt.s32.totalorder %s19, 1
        %s195 = scalar_select %p194, %s19, 1
        %p196 = scmp.lt.s32.totalorder %s20, 0
        %s197 = scalar_select %p196, %s20, 0
        %s198 = smul.addr %s195, 3
        %s199 = sadd.s32 %s197, %s198
        %s200 = smul.addr %s199, 8
        %s201 = scalar_lea.vmem %s0, %s200
        %p202 = scmp.lt.s32.totalorder %s19, 1
        %s203 = scalar_select %p202, %s19, 1
        %p204 = scmp.lt.s32.totalorder %s20, 0
        %s205 = scalar_select %p204, %s20, 0
        %s206 = sadd.s32 %s205, %s203
        %s207 = smul.addr %s206, 8
        %s208 = scalar_lea.vmem %s2, %s207
        %v209 = vld [vmem:[%s201] sm:$0xff]
        %v210 = vmul.f32 %v209, 255.0
        %s211 = scalar_lea.vmem %s201, 8
        %v212 = vld [vmem:[%s211] sm:$0xff]
        %v213 = vmul.f32 %v212, 255.0
        %s214 = scalar_lea.vmem %s201, 16
        %v215 = vld [vmem:[%s214] sm:$0xff]
        %v216 = vmul.f32 %v215, 255.0
        %v217 = vmul.f32 %v210, 0.299
        %v218 = vmul.f32 %v213, 0.587
        %v219 = vadd.f32 %v217, %v218
        %v220 = vmul.f32 %v216, 0.114
        %v221 = vadd.f32 %v219, %v220
        %vm222 = vcmask 261120
        %223 = vst.msk [vmem:[%s208] sm:$0xff] %vm222, %v221
        %v224 = vmul.f32 %v210, -0.168736
        %v225 = vmul.f32 %v213, 0.331264
        %v226 = vsub.f32 %v224, %v225
        %v227 = vmul.f32 %v216, 0.5
        %v228 = vadd.f32 %v226, %v227
        %v229 = vadd.f32 %v228, 128.0
        %v230 = vmul.f32 %v210, 0.5
        %v231 = vmul.f32 %v213, 0.418688
        %v232 = vsub.f32 %v230, %v231
        %v233 = vmul.f32 %v216, 0.081312
        %v234 = vsub.f32 %v232, %v233
        %v235 = vadd.f32 %v234, 128.0
        %v236 = vld [vmem:[%s1] sm:$0xff]
        %v237 = vld [vmem:[%s1 + $0x8] sm:$0xff]
        %v238 = vld [vmem:[%s1 + $0x10] sm:$0xff]
        %v239 = vld [vmem:[%s1 + $0x18] sm:$0xff]
        %v241 = vsel %vm222, %v229, 0
        %243 = vmatprep.subr.mxu0 0.0
        %244 = vmatpush1.msra.mxu0 0.0
        %245 = vmatprep.subr.mxu0 0.0
        %246 = vmatpush1.msra.mxu0 0.0
        %247 = vmatprep.subr.mxu0 0.0
        %248 = vmatpush1.msra.mxu0 0.0
        %249 = vmatprep.subr.mxu0 0.0
        %250 = vmatpush1.msra.mxu0 0.0
        %251 = vmatprep.subr.mxu0 0.0
        %252 = vmatpush1.msra.mxu0 0.0
        %253 = vmatprep.subr.mxu0 0.0
        %254 = vmatpush1.msra.mxu0 0.0
        %255 = vmatprep.subr.mxu0 0.0
        %256 = vmatpush1.msra.mxu0 0.0
        %257 = vmatprep.subr.mxu0 0.0
        %258 = vmatpush1.msra.mxu0 0.0
        %259 = vmatprep.subr.mxu0 0.0
        %260 = vmatpush1.msra.mxu0 0.0
        %261 = vmatprep.subr.mxu0 0.0
        %262 = vmatpush1.msra.mxu0 0.0
        %263 = vmatprep.subr.mxu0 0.0
        %264 = vmatpush1.msra.mxu0 0.0
        %265 = vmatprep.subr.mxu0 0.0
        %266 = vmatpush1.msra.mxu0 0.0
        %267 = vmatprep.subr.mxu0 0.0
        %268 = vmatpush1.msra.mxu0 %v239
        %269 = vmatprep.subr.mxu0 0.0
        %270 = vmatpush1.msra.mxu0 %v238
        %271 = vmatprep.subr.mxu0 0.0
        %272 = vmatpush1.msra.mxu0 %v237
        %273 = vmatprep.subr.mxu0 0.0
        %274 = vmatpush1.msra.mxu0 %v236
        %275 = vmatprep.subr.mxu0 0.0
        %276 = vmatpush2.msra.mxu0 0.0
        %277 = vmatprep.subr.mxu0 0.0
        %278 = vmatpush2.msra.mxu0 0.0
        %279 = vmatprep.subr.mxu0 0.0
        %280 = vmatpush2.msra.mxu0 0.0
        %281 = vmatprep.subr.mxu0 0.0
        %282 = vmatpush2.msra.mxu0 0.0
        %283 = vmatprep.subr.mxu0 0.0
        %284 = vmatpush2.msra.mxu0 0.0
        %285 = vmatprep.subr.mxu0 0.0
        %286 = vmatpush2.msra.mxu0 0.0
        %287 = vmatprep.subr.mxu0 0.0
        %288 = vmatpush2.msra.mxu0 0.0
        %289 = vmatprep.subr.mxu0 0.0
        %290 = vmatpush2.msra.mxu0 0.0
        %291 = vmatprep.subr.mxu0 0.0
        %292 = vmatpush2.msra.mxu0 0.0
        %293 = vmatprep.subr.mxu0 0.0
        %294 = vmatpush2.msra.mxu0 0.0
        %295 = vmatprep.subr.mxu0 0.0
        %296 = vmatpush2.msra.mxu0 0.0
        %297 = vmatprep.subr.mxu0 0.0
        %298 = vmatpush2.msra.mxu0 0.0
        %299 = vmatprep.subr.mxu0 0.0
        %300 = vmatpush2.msra.mxu0 0.0
        %301 = vmatprep.subr.mxu0 0.0
        %302 = vmatpush2.msra.mxu0 0.0
        %303 = vmatprep.subr.mxu0 0.0
        %304 = vmatpush2.msra.mxu0 0.0
        %305 = vmatprep.subr.mxu0 0.0
        %306 = vmatpush2.msra.mxu0 0.0
        %307 = vmatprep.mubr.f32.mxu0 0.0
        %308 = vmatmul.mubr.f32.gmra.mxu0 %v241
        %v309 = vpop.f32.mrf.mxu0
        %v310 = vadd.f32 0.0, %v309
        %v311 = vpop.f32.mrf.mxu0
        %312 = vdwg.mxu0
        %vm313 = vcmask 64512
        %314 = vst.msk [vmem:[%s193] sm:$0xff] %vm313, %v310
        %v316 = vsel %vm222, %v235, 0
        %318 = vmatprep.subr.mxu0 0.0
        %319 = vmatpush1.msra.mxu0 0.0
        %320 = vmatprep.subr.mxu0 0.0
        %321 = vmatpush1.msra.mxu0 0.0
        %322 = vmatprep.subr.mxu0 0.0
        %323 = vmatpush1.msra.mxu0 0.0
        %324 = vmatprep.subr.mxu0 0.0
        %325 = vmatpush1.msra.mxu0 0.0
        %326 = vmatprep.subr.mxu0 0.0
        %327 = vmatpush1.msra.mxu0 0.0
        %328 = vmatprep.subr.mxu0 0.0
        %329 = vmatpush1.msra.mxu0 0.0
        %330 = vmatprep.subr.mxu0 0.0
        %331 = vmatpush1.msra.mxu0 0.0
        %332 = vmatprep.subr.mxu0 0.0
        %333 = vmatpush1.msra.mxu0 0.0
        %334 = vmatprep.subr.mxu0 0.0
        %335 = vmatpush1.msra.mxu0 0.0
        %336 = vmatprep.subr.mxu0 0.0
        %337 = vmatpush1.msra.mxu0 0.0
        %338 = vmatprep.subr.mxu0 0.0
        %339 = vmatpush1.msra.mxu0 0.0
        %340 = vmatprep.subr.mxu0 0.0
        %341 = vmatpush1.msra.mxu0 0.0
        %342 = vmatprep.subr.mxu0 0.0
        %343 = vmatpush1.msra.mxu0 %v239
        %344 = vmatprep.subr.mxu0 0.0
        %345 = vmatpush1.msra.mxu0 %v238
        %346 = vmatprep.subr.mxu0 0.0
        %347 = vmatpush1.msra.mxu0 %v237
        %348 = vmatprep.subr.mxu0 0.0
        %349 = vmatpush1.msra.mxu0 %v236
        %350 = vmatprep.subr.mxu0 0.0
        %351 = vmatpush2.msra.mxu0 0.0
        %352 = vmatprep.subr.mxu0 0.0
        %353 = vmatpush2.msra.mxu0 0.0
        %354 = vmatprep.subr.mxu0 0.0
        %355 = vmatpush2.msra.mxu0 0.0
        %356 = vmatprep.subr.mxu0 0.0
        %357 = vmatpush2.msra.mxu0 0.0
        %358 = vmatprep.subr.mxu0 0.0
        %359 = vmatpush2.msra.mxu0 0.0
        %360 = vmatprep.subr.mxu0 0.0
        %361 = vmatpush2.msra.mxu0 0.0
        %362 = vmatprep.subr.mxu0 0.0
        %363 = vmatpush2.msra.mxu0 0.0
        %364 = vmatprep.subr.mxu0 0.0
        %365 = vmatpush2.msra.mxu0 0.0
        %366 = vmatprep.subr.mxu0 0.0
        %367 = vmatpush2.msra.mxu0 0.0
        %368 = vmatprep.subr.mxu0 0.0
        %369 = vmatpush2.msra.mxu0 0.0
        %370 = vmatprep.subr.mxu0 0.0
        %371 = vmatpush2.msra.mxu0 0.0
        %372 = vmatprep.subr.mxu0 0.0
        %373 = vmatpush2.msra.mxu0 0.0
        %374 = vmatprep.subr.mxu0 0.0
        %375 = vmatpush2.msra.mxu0 0.0
        %376 = vmatprep.subr.mxu0 0.0
        %377 = vmatpush2.msra.mxu0 0.0
        %378 = vmatprep.subr.mxu0 0.0
        %379 = vmatpush2.msra.mxu0 0.0
        %380 = vmatprep.subr.mxu0 0.0
        %381 = vmatpush2.msra.mxu0 0.0
        %382 = vmatprep.mubr.f32.mxu0 0.0
        %383 = vmatmul.mubr.f32.gmra.mxu0 %v316
        %v384 = vpop.f32.mrf.mxu0
        %v385 = vadd.f32 0.0, %v384
        %v386 = vpop.f32.mrf.mxu0
        %387 = vdwg.mxu0
        %s388 = scalar_lea.vmem %s193, 8 [#allocation2]
        %389 = vst.msk [vmem:[%s388] sm:$0xff] %vm313, %v385
        %p390 = scmp.lt.s32.totalorder %s19, 1
        %s391 = scalar_select %p390, %s19, 1
        %p392 = scmp.lt.s32.totalorder %s20, 0
        %s393 = scalar_select %p392, %s20, 0
        %s394 = sadd.s32 %s393, %s391
        %s395 = smul.addr %s394, 8
        %s396 = scalar_lea.vmem %s2, %s395
        %s397 = sand.u32 %s114, 1
        %s398 = sand.u32 %s114, 1
        %s399 = smul.addr %s398, 16
        %s400 = scalar_lea.vmem [#allocation2], %s399
        // Predicated region
        $region29: #{_lambda_.4} parent=27 // pred_check
          %p401 = pneg %p96
        $region30: #{_lambda_.4} parent=27 // pred_check_branch
          %403 = sbr.rel (%p401) target = $region32
        $region31: #{_lambda_.4} parent=27 // pred_region
          _
        $region32: #{_lambda_.4} parent=27 // pred_fallthru
          _
        // Predicated region
        $region33: #{_lambda_.4} parent=27 // pred_check
          %p404 = pneg %p124
        $region34: #{_lambda_.4} parent=27 // pred_check_branch
          %406 = sbr.rel (%p404) target = $region36
        $region35: #{_lambda_.4} parent=27 // pred_region
          %s407 = sadd.s32 %s20, %s19
          %s408 = smul.addr %s407, 8
          %s409 = scalar_lea.vmem %s3, %s408
          // Predicated region
          $region37: #{_lambda_.4} parent=35 // pred_check
            _
          $region38: #{_lambda_.4} parent=35 // pred_check_branch
            %411 = sbr.rel (0) target = $region40
          $region39: #{_lambda_.4} parent=35 // pred_region
            // Predicated region
            $region41: #{_lambda_.4} parent=39 // pred_check
              _
            $region42: #{_lambda_.4} parent=39 // pred_check_branch
              %413 = sbr.rel (0) target = $region44
            $region43: #{_lambda_.4} parent=39 // pred_region
              // Predicated region
              $region56: #{_lambda_.4} parent=43 // pred_check
                _
              $region57: #{_lambda_.4} parent=43 // pred_check_branch
                %431 = sbr.rel (0) target = $region59
              $region58: #{_lambda_.4} parent=43 // pred_region
                loop: start=0, step=1, limit=1
                $region60: #{_lambda_.4} parent=58 // loop_pre_header
                  _
                $region61: #{_lambda_.4} parent=58 // loop_header
                  %s433 = sphi 0, %s437
                  %p434 = scmp.ge.s32.totalorder %s433, 1
                  %s438 = sphi %s400, %s400
                  %s439 = sphi %s409, %s409
                $region62: #{_lambda_.4} parent=58 // loop_header_branch
                  %436 = sbr.rel (%p434) target = $region66
                $region63: #{_lambda_.4} parent=58 // loop_body
                  %v440 = vld [vmem:[%s438] sm:$0xff]
                  %441 = vst [vmem:[%s439] sm:$0xff] %v440
                  %v442 = vld [vmem:[%s438 + $0x8] sm:$0xff]
                  %443 = vst [vmem:[%s439 + $0x10] sm:$0xff] %v442
                $region64: #{_lambda_.4} parent=58 // loop_footer
                  %s437 = sadd.s32 1, %s433
                $region65: #{_lambda_.4} parent=58 // loop_footer_branch
                  %432 = sbr.rel target = $region61
                $region66: #{_lambda_.4} parent=58 // loop_exit
                  _
              $region59: #{_lambda_.4} parent=43 // pred_fallthru
                _
              // Predicated region
              $region67: #{_lambda_.4} parent=43 // pred_check
                _
              $region68: #{_lambda_.4} parent=43 // pred_check_branch
                %445 = sbr.rel target = $region70
              $region69: #{_lambda_.4} parent=43 // pred_region
                _
              $region70: #{_lambda_.4} parent=43 // pred_fallthru
                _
            $region44: #{_lambda_.4} parent=39 // pred_fallthru
              _
            // Predicated region
            $region45: #{_lambda_.4} parent=39 // pred_check
              _
            $region46: #{_lambda_.4} parent=39 // pred_check_branch
              %415 = sbr.rel target = $region48
            $region47: #{_lambda_.4} parent=39 // pred_region
              %s417 = ssub.s32 256, 1
              loop: start=0, step=1, limit=1
              $region49: #{_lambda_.4} parent=47 // loop_pre_header
                _
              $region50: #{_lambda_.4} parent=47 // loop_header
                %s419 = sphi 0, %s423
                %p420 = scmp.ge.s32.totalorder %s419, 1
                %s424 = sphi %s400, %s400
                %s425 = sphi %s409, %s409
              $region51: #{_lambda_.4} parent=47 // loop_header_branch
                %422 = sbr.rel (%p420) target = $region55
              $region52: #{_lambda_.4} parent=47 // loop_body
                %v426 = vld [vmem:[%s424] sm:%s417]
                %427 = vst [vmem:[%s425] sm:%s417] %v426
                %v428 = vld [vmem:[%s424 + $0x8] sm:%s417]
                %429 = vst [vmem:[%s425 + $0x10] sm:%s417] %v428
              $region53: #{_lambda_.4} parent=47 // loop_footer
                %s423 = sadd.s32 1, %s419
              $region54: #{_lambda_.4} parent=47 // loop_footer_branch
                %418 = sbr.rel target = $region50
              $region55: #{_lambda_.4} parent=47 // loop_exit
                _
            $region48: #{_lambda_.4} parent=39 // pred_fallthru
              _
          $region40: #{_lambda_.4} parent=35 // pred_fallthru
            _
          %446 = vnop
        $region36: #{_lambda_.4} parent=27 // pred_fallthru
          _
      $region28: #{_lambda_.4} parent=5 // pred_fallthru
        _
      %p447 = scmp.le.s32.totalorder 2, %s10
      // Predicated region
      $region71: #{_lambda_.4} parent=5 // pred_check
        %p448 = pneg %p447
      $region72: #{_lambda_.4} parent=5 // pred_check_branch
        %450 = sbr.rel (%p448) target = $region74
      $region73: #{_lambda_.4} parent=5 // pred_region
        %s451 = ssub.s32 %s10, 2
        // Predicated region
        $region75: #{_lambda_.4} parent=73 // pred_check
          %p452 = pneg %p102
        $region76: #{_lambda_.4} parent=73 // pred_check_branch
          %454 = sbr.rel (%p452) target = $region78
        $region77: #{_lambda_.4} parent=73 // pred_region
          %p455 = scmp.lt.s32.totalorder %s21, 1
          %s456 = scalar_select %p455, %s21, 1
          %p457 = scmp.lt.s32.totalorder %s22, 0
          %s458 = scalar_select %p457, %s22, 0
          %s459 = sadd.s32 %s458, %s456
          %s460 = smul.addr %s459, 8
          %s461 = scalar_lea.vmem %s2, %s460
        $region78: #{_lambda_.4} parent=73 // pred_fallthru
          _
        // Predicated region
        $region79: #{_lambda_.4} parent=73 // pred_check
          %p462 = pneg %p130
        $region80: #{_lambda_.4} parent=73 // pred_check_branch
          %464 = sbr.rel (%p462) target = $region82
        $region81: #{_lambda_.4} parent=73 // pred_region
          %s465 = sand.u32 %s115, 1
          %s466 = sand.u32 %s115, 1
          %s467 = smul.addr %s466, 16
          %s468 = scalar_lea.vmem [#allocation2], %s467
        $region82: #{_lambda_.4} parent=73 // pred_fallthru
          _
      $region74: #{_lambda_.4} parent=5 // pred_fallthru
        _
    $region6: #{_lambda_.4} parent=1 // loop_footer
      %s14 = sadd.s32 1, %s10
    $region7: #{_lambda_.4} parent=1 // loop_footer_branch
      %9 = sbr.rel target = $region3
    $region8: #{_lambda_.4} parent=1 // loop_exit
      _

// kernel: _lambda_.6
$region0: #{_lambda_.6}
  #allocation0 [shape = 'u32[]', space=smem, size = 0x4, offset = 0x4, fixed_abs, tag = 'smem constant byte address 0x4 - core index']
  #allocation1 [shape = 'u32[144,128]{1,0:T(1,128)}', space=vmem, size = 0x12000, scoped, tag = 'internal scratch']
  %s0 = inlined_call_operand.vmem [shape: bf16[1,256], index: 0, kind: input, shape index: {}]
  %s1 = inlined_call_operand.hbm [shape: bf16[256,256], index: 1, kind: input, shape index: {}]
  %s2 = inlined_call_operand.vmem [shape: bf16[256,256], index: 2, kind: input, shape index: {}]
  %s3 = inlined_call_operand.vmem [shape: f32[1,256], index: 3, kind: output, shape index: {}]
  %s4 = sld [smem:[#allocation0]]
  $region26: #{_lambda_.6} parent=0
    _
  %s6 = ssub.s32 1, %s4
  %s7 = scalar_select 0, %s6, %s4
  $region1: #{_lambda_.6} parent=0
    #allocation2 [shape = 'u8[131072]{0}', space=vmem, size = 0x20000, scoped, tag = 'input window, operand 1, single buffered']
    #allocation3 [shape = 's32[1]{0}', space=sflag, size = 0x4, scoped, tag = 'scoped memory for _lambda_.6']
    %8 = vsyncpa [#allocation3], 0
    // Predicated region
    $region2: #{_lambda_.6} parent=1 // pred_check
      _
    $region3: #{_lambda_.6} parent=1 // pred_check_branch
      %10 = sbr.rel (0) target = $region5
    $region4: #{_lambda_.6} parent=1 // pred_region
      _
    $region5: #{_lambda_.6} parent=1 // pred_fallthru
      _
    // Predicated region
    $region6: #{_lambda_.6} parent=1 // pred_check
      _
    $region7: #{_lambda_.6} parent=1 // pred_check_branch
      %12 = sbr.rel (0) target = $region9
    $region8: #{_lambda_.6} parent=1 // pred_region
      %s14 = ssub.s32 4096, 4096
      %15 = vsyncadd [#allocation3], %s14
      %s16 = sshll.u32 [#allocation2], 4
      %s17 = int_to_ptr.vmem [resolvable:$true] %s16
      %22 = dma.hbm_to_vmem [thread:$0]  %s1, 4096, %s17, [#allocation3], 128, 128, 8
    $region9: #{_lambda_.6} parent=1 // pred_fallthru
      _
    // Predicated region
    $region10: #{_lambda_.6} parent=1 // pred_check
      _
    $region11: #{_lambda_.6} parent=1 // pred_check_branch
      %24 = sbr.rel (0) target = $region13
    $region12: #{_lambda_.6} parent=1 // pred_region
      _
    $region13: #{_lambda_.6} parent=1 // pred_fallthru
      _
    // Predicated region
    $region14: #{_lambda_.6} parent=1 // pred_check
      _
    $region15: #{_lambda_.6} parent=1 // pred_check_branch
      %26 = sbr.rel (0) target = $region17
    $region16: #{_lambda_.6} parent=1 // pred_region
      %27 = dma.done [#allocation3], 4096
    $region17: #{_lambda_.6} parent=1 // pred_fallthru
      _
    %v29 = vld [vmem:[%s0] sm:$0x3]
    %v30 = vsub.bf16 %v29, 1124090624
    %v31 = vld [vmem:[#allocation2] sm:$0xff]
    %v32 = vld [vmem:[#allocation2 + $0x8] sm:$0xff]
    %v33 = vld [vmem:[#allocation2 + $0x10] sm:$0xff]
    %v34 = vld [vmem:[#allocation2 + $0x18] sm:$0xff]
    %v35 = vld [vmem:[#allocation2 + $0x20] sm:$0xff]
    %v36 = vld [vmem:[#allocation2 + $0x28] sm:$0xff]
    %v37 = vld [vmem:[#allocation2 + $0x30] sm:$0xff]
    %v38 = vld [vmem:[#allocation2 + $0x38] sm:$0xff]
    %v39 = vld [vmem:[#allocation2 + $0x40] sm:$0xff]
    %v40 = vld [vmem:[#allocation2 + $0x48] sm:$0xff]
    %v41 = vld [vmem:[#allocation2 + $0x50] sm:$0xff]
    %v42 = vld [vmem:[#allocation2 + $0x58] sm:$0xff]
    %v43 = vld [vmem:[#allocation2 + $0x60] sm:$0xff]
    %v44 = vld [vmem:[#allocation2 + $0x68] sm:$0xff]
    %v45 = vld [vmem:[#allocation2 + $0x70] sm:$0xff]
    %v46 = vld [vmem:[#allocation2 + $0x78] sm:$0xff]
    %v47 = vld [vmem:[#allocation2 + $0x80] sm:$0xff]
    %v48 = vld [vmem:[#allocation2 + $0x88] sm:$0xff]
    %v49 = vld [vmem:[#allocation2 + $0x90] sm:$0xff]
    %v50 = vld [vmem:[#allocation2 + $0x98] sm:$0xff]
    %v51 = vld [vmem:[#allocation2 + $0xa0] sm:$0xff]
    %v52 = vld [vmem:[#allocation2 + $0xa8] sm:$0xff]
    %v53 = vld [vmem:[#allocation2 + $0xb0] sm:$0xff]
    %v54 = vld [vmem:[#allocation2 + $0xb8] sm:$0xff]
    %v55 = vld [vmem:[#allocation2 + $0xc0] sm:$0xff]
    %v56 = vld [vmem:[#allocation2 + $0xc8] sm:$0xff]
    %v57 = vld [vmem:[#allocation2 + $0xd0] sm:$0xff]
    %v58 = vld [vmem:[#allocation2 + $0xd8] sm:$0xff]
    %v59 = vld [vmem:[#allocation2 + $0xe0] sm:$0xff]
    %v60 = vld [vmem:[#allocation2 + $0xe8] sm:$0xff]
    %v61 = vld [vmem:[#allocation2 + $0xf0] sm:$0xff]
    %v62 = vld [vmem:[#allocation2 + $0xf8] sm:$0xff]
    %v65 = vunpack.c.l.s4 1966171168
    %v66 = vunpack.c.0.s8 %v65
    %v67 = vlaneseq
    %v68 = vshrl.u32 %v67, 7
    %v69 = vsub.s32 %v66, %v68
    %v70 = vrot.slane %v30, %v69
    %v71 = vcombine.high %v70, %v70
    %v73 = vunpack.c.l.s4 1966171168
    %v74 = vunpack.c.0.s8 %v73
    %v75 = vlaneseq
    %v76 = vshrl.u32 %v75, 7
    %v77 = vsub.s32 %v74, %v76
    %v78 = vrot.slane %v70, %v77
    %v80 = vunpack.c.l.s4 1966171168
    %v81 = vunpack.c.0.s8 %v80
    %v82 = vlaneseq
    %v83 = vshrl.u32 %v82, 7
    %v84 = vsub.s32 %v81, %v83
    %v85 = vrot.slane %v71, %v84
    %v120 = vunpack.c.l.b16 %v31
    %v121 = vunpack.c.h.b16 %v31
    %v122 = vunpack.c.l.b16 %v32
    %v123 = vunpack.c.h.b16 %v32
    %v124 = vunpack.c.l.b16 %v33
    %v125 = vunpack.c.h.b16 %v33
    %v126 = vunpack.c.l.b16 %v34
    %v127 = vunpack.c.h.b16 %v34
    %v128 = vunpack.c.l.b16 %v35
    %v129 = vunpack.c.h.b16 %v35
    %v130 = vunpack.c.l.b16 %v36
    %v131 = vunpack.c.h.b16 %v36
    %v132 = vunpack.c.l.b16 %v37
    %v133 = vunpack.c.h.b16 %v37
    %v134 = vunpack.c.l.b16 %v38
    %v135 = vunpack.c.h.b16 %v38
    %v136 = vunpack.c.l.b16 %v39
    %v137 = vunpack.c.h.b16 %v39
    %v138 = vunpack.c.l.b16 %v40
    %v139 = vunpack.c.h.b16 %v40
    %v140 = vunpack.c.l.b16 %v41
    %v141 = vunpack.c.h.b16 %v41
    %v142 = vunpack.c.l.b16 %v42
    %v143 = vunpack.c.h.b16 %v42
    %v144 = vunpack.c.l.b16 %v43
    %v145 = vunpack.c.h.b16 %v43
    %v146 = vunpack.c.l.b16 %v44
    %v147 = vunpack.c.h.b16 %v44
    %v148 = vunpack.c.l.b16 %v45
    %v149 = vunpack.c.h.b16 %v45
    %v150 = vunpack.c.l.b16 %v46
    %v151 = vunpack.c.h.b16 %v46
    %v152 = vunpack.c.l.b16 %v47
    %v153 = vunpack.c.h.b16 %v47
    %v154 = vunpack.c.l.b16 %v48
    %v155 = vunpack.c.h.b16 %v48
    %v156 = vunpack.c.l.b16 %v49
    %v157 = vunpack.c.h.b16 %v49
    %v158 = vunpack.c.l.b16 %v50
    %v159 = vunpack.c.h.b16 %v50
    %v160 = vunpack.c.l.b16 %v51
    %v161 = vunpack.c.h.b16 %v51
    %v162 = vunpack.c.l.b16 %v52
    %v163 = vunpack.c.h.b16 %v52
    %v164 = vunpack.c.l.b16 %v53
    %v165 = vunpack.c.h.b16 %v53
    %v166 = vunpack.c.l.b16 %v54
    %v167 = vunpack.c.h.b16 %v54
    %v168 = vunpack.c.l.b16 %v55
    %v169 = vunpack.c.h.b16 %v55
    %v170 = vunpack.c.l.b16 %v56
    %v171 = vunpack.c.h.b16 %v56
    %v172 = vunpack.c.l.b16 %v57
    %v173 = vunpack.c.h.b16 %v57
    %v174 = vunpack.c.l.b16 %v58
    %v175 = vunpack.c.h.b16 %v58
    %v176 = vunpack.c.l.b16 %v59
    %v177 = vunpack.c.h.b16 %v59
    %v178 = vunpack.c.l.b16 %v60
    %v179 = vunpack.c.h.b16 %v60
    %v180 = vunpack.c.l.b16 %v61
    %v181 = vunpack.c.h.b16 %v61
    %v182 = vunpack.c.l.b16 %v62
    %v183 = vunpack.c.h.b16 %v62
    %v184 = vpack.c.b16 %v122, %v120
    %v185 = vpack.c.b16 %v123, %v121
    %v186 = vpack.c.b16 %v126, %v124
    %v187 = vpack.c.b16 %v127, %v125
    %v188 = vpack.c.b16 %v130, %v128
    %v189 = vpack.c.b16 %v131, %v129
    %v190 = vpack.c.b16 %v134, %v132
    %v191 = vpack.c.b16 %v135, %v133
    %v192 = vpack.c.b16 %v138, %v136
    %v193 = vpack.c.b16 %v139, %v137
    %v194 = vpack.c.b16 %v142, %v140
    %v195 = vpack.c.b16 %v143, %v141
    %v196 = vpack.c.b16 %v146, %v144
    %v197 = vpack.c.b16 %v147, %v145
    %v198 = vpack.c.b16 %v150, %v148
    %v199 = vpack.c.b16 %v151, %v149
    %v200 = vpack.c.b16 %v154, %v152
    %v201 = vpack.c.b16 %v155, %v153
    %v202 = vpack.c.b16 %v158, %v156
    %v203 = vpack.c.b16 %v159, %v157
    %v204 = vpack.c.b16 %v162, %v160
    %v205 = vpack.c.b16 %v163, %v161
    %v206 = vpack.c.b16 %v166, %v164
    %v207 = vpack.c.b16 %v167, %v165
    %v208 = vpack.c.b16 %v170, %v168
    %v209 = vpack.c.b16 %v171, %v169
    %v210 = vpack.c.b16 %v174, %v172
    %v211 = vpack.c.b16 %v175, %v173
    %v212 = vpack.c.b16 %v178, %v176
    %v213 = vpack.c.b16 %v179, %v177
    %v214 = vpack.c.b16 %v182, %v180
    %v215 = vpack.c.b16 %v183, %v181
    %248 = vmatprep.subr.bf16.mxu0 %v199
    %249 = vmatpush1.bf16.msra.mxu0 %v198
    %250 = vmatprep.subr.bf16.mxu0 %v197
    %251 = vmatpush1.bf16.msra.mxu0 %v196
    %252 = vmatprep.subr.bf16.mxu0 %v195
    %253 = vmatpush1.bf16.msra.mxu0 %v194
    %254 = vmatprep.subr.bf16.mxu0 %v193
    %255 = vmatpush1.bf16.msra.mxu0 %v192
    %256 = vmatprep.subr.bf16.mxu0 %v191
    %257 = vmatpush1.bf16.msra.mxu0 %v190
    %258 = vmatprep.subr.bf16.mxu0 %v189
    %259 = vmatpush1.bf16.msra.mxu0 %v188
    %260 = vmatprep.subr.bf16.mxu0 %v187
    %261 = vmatpush1.bf16.msra.mxu0 %v186
    %262 = vmatprep.subr.bf16.mxu0 %v185
    %263 = vmatpush1.bf16.msra.mxu0 %v184
    %264 = vmatprep.subr.bf16.mxu0 %v215
    %265 = vmatpush2.bf16.msra.mxu0 %v214
    %266 = vmatprep.subr.bf16.mxu0 %v213
    %267 = vmatpush2.bf16.msra.mxu0 %v212
    %268 = vmatprep.subr.bf16.mxu0 %v211
    %269 = vmatpush2.bf16.msra.mxu0 %v210
    %270 = vmatprep.subr.bf16.mxu0 %v209
    %271 = vmatpush2.bf16.msra.mxu0 %v208
    %272 = vmatprep.subr.bf16.mxu0 %v207
    %273 = vmatpush2.bf16.msra.mxu0 %v206
    %274 = vmatprep.subr.bf16.mxu0 %v205
    %275 = vmatpush2.bf16.msra.mxu0 %v204
    %276 = vmatprep.subr.bf16.mxu0 %v203
    %277 = vmatpush2.bf16.msra.mxu0 %v202
    %278 = vmatprep.subr.bf16.mxu0 %v201
    %279 = vmatpush2.bf16.msra.mxu0 %v200
    %280 = vmatprep.mubr.bf16.mxu0 %v85
    %281 = vmatmul.mubr.bf16.gmra.mxu0 %v78
    %v282 = vpop.f32.mrf.mxu0
    %v283 = vadd.f32 0.0, %v282
    %v284 = vpop.f32.mrf.mxu0
    %v285 = vadd.f32 0.0, %v284
    %v286 = vpop.f32.mrf.mxu0
    %v287 = vpop.f32.mrf.mxu0
    %288 = vdwg.mxu0
    %v289 = vround.ne.pseudo %v283
    %v290 = vround.ne.pseudo %v285
    %v291 = vsub.f32 %v283, %v289
    %v292 = vsub.f32 %v285, %v290
    %v293 = vmul.f32 %v291, %v291
    %v294 = vmul.f32 %v292, %v292
    %v295 = vmul.f32 %v291, %v293
    %v296 = vmul.f32 %v292, %v294
    %v297 = vadd.f32 %v289, %v295
    %v298 = vadd.f32 %v290, %v296
    %v299 = vpack.c.bf16 %v297, %v297
    %v300 = vpack.c.bf16 %v298, %v298
    %v301 = vld [vmem:[%s2] sm:$0xff]
    %v302 = vld [vmem:[%s2 + $0x8] sm:$0xff]
    %v303 = vld [vmem:[%s2 + $0x10] sm:$0xff]
    %v304 = vld [vmem:[%s2 + $0x18] sm:$0xff]
    %v305 = vld [vmem:[%s2 + $0x20] sm:$0xff]
    %v306 = vld [vmem:[%s2 + $0x28] sm:$0xff]
    %v307 = vld [vmem:[%s2 + $0x30] sm:$0xff]
    %v308 = vld [vmem:[%s2 + $0x38] sm:$0xff]
    %v309 = vld [vmem:[%s2 + $0x40] sm:$0xff]
    %v310 = vld [vmem:[%s2 + $0x48] sm:$0xff]
    %v311 = vld [vmem:[%s2 + $0x50] sm:$0xff]
    %v312 = vld [vmem:[%s2 + $0x58] sm:$0xff]
    %v313 = vld [vmem:[%s2 + $0x60] sm:$0xff]
    %v314 = vld [vmem:[%s2 + $0x68] sm:$0xff]
    %v315 = vld [vmem:[%s2 + $0x70] sm:$0xff]
    %v316 = vld [vmem:[%s2 + $0x78] sm:$0xff]
    %v317 = vld [vmem:[%s2 + $0x80] sm:$0xff]
    %v318 = vld [vmem:[%s2 + $0x88] sm:$0xff]
    %v319 = vld [vmem:[%s2 + $0x90] sm:$0xff]
    %v320 = vld [vmem:[%s2 + $0x98] sm:$0xff]
    %v321 = vld [vmem:[%s2 + $0xa0] sm:$0xff]
    %v322 = vld [vmem:[%s2 + $0xa8] sm:$0xff]
    %v323 = vld [vmem:[%s2 + $0xb0] sm:$0xff]
    %v324 = vld [vmem:[%s2 + $0xb8] sm:$0xff]
    %v325 = vld [vmem:[%s2 + $0xc0] sm:$0xff]
    %v326 = vld [vmem:[%s2 + $0xc8] sm:$0xff]
    %v327 = vld [vmem:[%s2 + $0xd0] sm:$0xff]
    %v328 = vld [vmem:[%s2 + $0xd8] sm:$0xff]
    %v329 = vld [vmem:[%s2 + $0xe0] sm:$0xff]
    %v330 = vld [vmem:[%s2 + $0xe8] sm:$0xff]
    %v331 = vld [vmem:[%s2 + $0xf0] sm:$0xff]
    %v332 = vld [vmem:[%s2 + $0xf8] sm:$0xff]
    %v365 = vunpack.c.l.b16 %v301
    %v366 = vunpack.c.h.b16 %v301
    %v367 = vunpack.c.l.b16 %v302
    %v368 = vunpack.c.h.b16 %v302
    %v369 = vunpack.c.l.b16 %v303
    %v370 = vunpack.c.h.b16 %v303
    %v371 = vunpack.c.l.b16 %v304
    %v372 = vunpack.c.h.b16 %v304
    %v373 = vunpack.c.l.b16 %v305
    %v374 = vunpack.c.h.b16 %v305
    %v375 = vunpack.c.l.b16 %v306
    %v376 = vunpack.c.h.b16 %v306
    %v377 = vunpack.c.l.b16 %v307
    %v378 = vunpack.c.h.b16 %v307
    %v379 = vunpack.c.l.b16 %v308
    %v380 = vunpack.c.h.b16 %v308
    %v381 = vunpack.c.l.b16 %v309
    %v382 = vunpack.c.h.b16 %v309
    %v383 = vunpack.c.l.b16 %v310
    %v384 = vunpack.c.h.b16 %v310
    %v385 = vunpack.c.l.b16 %v311
    %v386 = vunpack.c.h.b16 %v311
    %v387 = vunpack.c.l.b16 %v312
    %v388 = vunpack.c.h.b16 %v312
    %v389 = vunpack.c.l.b16 %v313
    %v390 = vunpack.c.h.b16 %v313
    %v391 = vunpack.c.l.b16 %v314
    %v392 = vunpack.c.h.b16 %v314
    %v393 = vunpack.c.l.b16 %v315
    %v394 = vunpack.c.h.b16 %v315
    %v395 = vunpack.c.l.b16 %v316
    %v396 = vunpack.c.h.b16 %v316
    %v397 = vunpack.c.l.b16 %v317
    %v398 = vunpack.c.h.b16 %v317
    %v399 = vunpack.c.l.b16 %v318
    %v400 = vunpack.c.h.b16 %v318
    %v401 = vunpack.c.l.b16 %v319
    %v402 = vunpack.c.h.b16 %v319
    %v403 = vunpack.c.l.b16 %v320
    %v404 = vunpack.c.h.b16 %v320
    %v405 = vunpack.c.l.b16 %v321
    %v406 = vunpack.c.h.b16 %v321
    %v407 = vunpack.c.l.b16 %v322
    %v408 = vunpack.c.h.b16 %v322
    %v409 = vunpack.c.l.b16 %v323
    %v410 = vunpack.c.h.b16 %v323
    %v411 = vunpack.c.l.b16 %v324
    %v412 = vunpack.c.h.b16 %v324
    %v413 = vunpack.c.l.b16 %v325
    %v414 = vunpack.c.h.b16 %v325
    %v415 = vunpack.c.l.b16 %v326
    %v416 = vunpack.c.h.b16 %v326
    %v417 = vunpack.c.l.b16 %v327
    %v418 = vunpack.c.h.b16 %v327
    %v419 = vunpack.c.l.b16 %v328
    %v420 = vunpack.c.h.b16 %v328
    %v421 = vunpack.c.l.b16 %v329
    %v422 = vunpack.c.h.b16 %v329
    %v423 = vunpack.c.l.b16 %v330
    %v424 = vunpack.c.h.b16 %v330
    %v425 = vunpack.c.l.b16 %v331
    %v426 = vunpack.c.h.b16 %v331
    %v427 = vunpack.c.l.b16 %v332
    %v428 = vunpack.c.h.b16 %v332
    %v429 = vpack.c.b16 %v367, %v365
    %v430 = vpack.c.b16 %v368, %v366
    %v431 = vpack.c.b16 %v371, %v369
    %v432 = vpack.c.b16 %v372, %v370
    %v433 = vpack.c.b16 %v375, %v373
    %v434 = vpack.c.b16 %v376, %v374
    %v435 = vpack.c.b16 %v379, %v377
    %v436 = vpack.c.b16 %v380, %v378
    %v437 = vpack.c.b16 %v383, %v381
    %v438 = vpack.c.b16 %v384, %v382
    %v439 = vpack.c.b16 %v387, %v385
    %v440 = vpack.c.b16 %v388, %v386
    %v441 = vpack.c.b16 %v391, %v389
    %v442 = vpack.c.b16 %v392, %v390
    %v443 = vpack.c.b16 %v395, %v393
    %v444 = vpack.c.b16 %v396, %v394
    %v445 = vpack.c.b16 %v399, %v397
    %v446 = vpack.c.b16 %v400, %v398
    %v447 = vpack.c.b16 %v403, %v401
    %v448 = vpack.c.b16 %v404, %v402
    %v449 = vpack.c.b16 %v407, %v405
    %v450 = vpack.c.b16 %v408, %v406
    %v451 = vpack.c.b16 %v411, %v409
    %v452 = vpack.c.b16 %v412, %v410
    %v453 = vpack.c.b16 %v415, %v413
    %v454 = vpack.c.b16 %v416, %v414
    %v455 = vpack.c.b16 %v419, %v417
    %v456 = vpack.c.b16 %v420, %v418
    %v457 = vpack.c.b16 %v423, %v421
    %v458 = vpack.c.b16 %v424, %v422
    %v459 = vpack.c.b16 %v427, %v425
    %v460 = vpack.c.b16 %v428, %v426
    %493 = vmatprep.subr.bf16.mxu0 %v444
    %494 = vmatpush1.bf16.msra.mxu0 %v443
    %495 = vmatprep.subr.bf16.mxu0 %v442
    %496 = vmatpush1.bf16.msra.mxu0 %v441
    %497 = vmatprep.subr.bf16.mxu0 %v440
    %498 = vmatpush1.bf16.msra.mxu0 %v439
    %499 = vmatprep.subr.bf16.mxu0 %v438
    %500 = vmatpush1.bf16.msra.mxu0 %v437
    %501 = vmatprep.subr.bf16.mxu0 %v436
    %502 = vmatpush1.bf16.msra.mxu0 %v435
    %503 = vmatprep.subr.bf16.mxu0 %v434
    %504 = vmatpush1.bf16.msra.mxu0 %v433
    %505 = vmatprep.subr.bf16.mxu0 %v432
    %506 = vmatpush1.bf16.msra.mxu0 %v431
    %507 = vmatprep.subr.bf16.mxu0 %v430
    %508 = vmatpush1.bf16.msra.mxu0 %v429
    %509 = vmatprep.subr.bf16.mxu0 %v460
    %510 = vmatpush2.bf16.msra.mxu0 %v459
    %511 = vmatprep.subr.bf16.mxu0 %v458
    %512 = vmatpush2.bf16.msra.mxu0 %v457
    %513 = vmatprep.subr.bf16.mxu0 %v456
    %514 = vmatpush2.bf16.msra.mxu0 %v455
    %515 = vmatprep.subr.bf16.mxu0 %v454
    %516 = vmatpush2.bf16.msra.mxu0 %v453
    %517 = vmatprep.subr.bf16.mxu0 %v452
    %518 = vmatpush2.bf16.msra.mxu0 %v451
    %519 = vmatprep.subr.bf16.mxu0 %v450
    %520 = vmatpush2.bf16.msra.mxu0 %v449
    %521 = vmatprep.subr.bf16.mxu0 %v448
    %522 = vmatpush2.bf16.msra.mxu0 %v447
    %523 = vmatprep.subr.bf16.mxu0 %v446
    %524 = vmatpush2.bf16.msra.mxu0 %v445
    %525 = vmatprep.mubr.bf16.mxu0 %v300
    %526 = vmatmul.mubr.bf16.gmra.mxu0 %v299
    %v527 = vpop.f32.mrf.mxu0
    %v528 = vadd.f32 128.0, %v527
    %v529 = vpop.f32.mrf.mxu0
    %v530 = vadd.f32 128.0, %v529
    %v531 = vpop.f32.mrf.mxu0
    %v532 = vpop.f32.mrf.mxu0
    %533 = vdwg.mxu0
    %v536 = vcombine.low %v528, %v530
    %v538 = vunpack.c.l.s4 1966171168
    %v539 = vunpack.c.0.s8 %v538
    %v540 = vlaneseq
    %v541 = vshrl.u32 %v540, 7
    %v542 = vsub.s32 %v539, %v541
    %v543 = vrot.slane %v536, %v542
    %v545 = vunpack.c.l.s4 1966171168
    %v546 = vunpack.c.0.s8 %v545
    %v547 = vlaneseq
    %v548 = vshrl.u32 %v547, 7
    %v549 = vsub.s32 %v546, %v548
    %v550 = vrot.slane %v543, %v549
    %v552 = vlaneseq
    %vm553 = vcmp.ge.s32.totalorder %v552, 0
    %vm554 = vcmp.lt.s32.totalorder %v552, 256
    %vm555 = vmand %vm553, %vm554
    %556 = vst.msk [vmem:[%s3] sm:$0x3] %vm555, %v550
    // Predicated region
    $region18: #{_lambda_.6} parent=1 // pred_check
      _
    $region19: #{_lambda_.6} parent=1 // pred_check_branch
      %558 = sbr.rel (0) target = $region21
    $region20: #{_lambda_.6} parent=1 // pred_region
      _
    $region21: #{_lambda_.6} parent=1 // pred_fallthru
      _
    // Predicated region
    $region22: #{_lambda_.6} parent=1 // pred_check
      _
    $region23: #{_lambda_.6} parent=1 // pred_check_branch
      %560 = sbr.rel (0) target = $region25
    $region24: #{_lambda_.6} parent=1 // pred_region
      _
    $region25: #{_lambda_.6} parent=1 // pred_fallthru
      _
    %561 = vsyncpa [#allocation3], 1

// kernel: _lambda_.5
$region0: #{_lambda_.5}
  #allocation0 [shape = 'u32[]', space=smem, size = 0x4, offset = 0x4, fixed_abs, tag = 'smem constant byte address 0x4 - core index']
  #allocation1 [shape = 'u32[144,128]{1,0:T(1,128)}', space=vmem, size = 0x12000, scoped, tag = 'internal scratch']
  %s0 = inlined_call_operand.vmem [shape: bf16[2,256], index: 0, kind: input, shape index: {}]
  %s1 = inlined_call_operand.vmem [shape: bf16[256,256], index: 1, kind: input, shape index: {}]
  %s2 = inlined_call_operand.vmem [shape: bf16[256,256], index: 2, kind: input, shape index: {}]
  %s3 = inlined_call_operand.vmem [shape: f32[2,256], index: 3, kind: output, shape index: {}]
  %s4 = sld [smem:[#allocation0]]
  $region22: #{_lambda_.5} parent=0
    _
  %s6 = ssub.s32 1, %s4
  %s7 = scalar_select 0, %s6, %s4
  // Predicated region
  $region2: #{_lambda_.5} parent=0 // pred_check
    _
  $region3: #{_lambda_.5} parent=0 // pred_check_branch
    %9 = sbr.rel (0) target = $region5
  $region4: #{_lambda_.5} parent=0 // pred_region
    _
  $region5: #{_lambda_.5} parent=0 // pred_fallthru
    _
  // Predicated region
  $region6: #{_lambda_.5} parent=0 // pred_check
    _
  $region7: #{_lambda_.5} parent=0 // pred_check_branch
    %11 = sbr.rel (0) target = $region9
  $region8: #{_lambda_.5} parent=0 // pred_region
    _
  $region9: #{_lambda_.5} parent=0 // pred_fallthru
    _
  // Predicated region
  $region10: #{_lambda_.5} parent=0 // pred_check
    _
  $region11: #{_lambda_.5} parent=0 // pred_check_branch
    %13 = sbr.rel (0) target = $region13
  $region12: #{_lambda_.5} parent=0 // pred_region
    _
  $region13: #{_lambda_.5} parent=0 // pred_fallthru
    _
  %v15 = vld [vmem:[%s0] sm:$0x3]
  %v16 = vsub.bf16 %v15, 1124090624
  %v17 = vld [vmem:[%s1] sm:$0xff]
  %v18 = vld [vmem:[%s1 + $0x8] sm:$0xff]
  %v19 = vld [vmem:[%s1 + $0x10] sm:$0xff]
  %v20 = vld [vmem:[%s1 + $0x18] sm:$0xff]
  %v21 = vld [vmem:[%s1 + $0x20] sm:$0xff]
  %v22 = vld [vmem:[%s1 + $0x28] sm:$0xff]
  %v23 = vld [vmem:[%s1 + $0x30] sm:$0xff]
  %v24 = vld [vmem:[%s1 + $0x38] sm:$0xff]
  %v25 = vld [vmem:[%s1 + $0x40] sm:$0xff]
  %v26 = vld [vmem:[%s1 + $0x48] sm:$0xff]
  %v27 = vld [vmem:[%s1 + $0x50] sm:$0xff]
  %v28 = vld [vmem:[%s1 + $0x58] sm:$0xff]
  %v29 = vld [vmem:[%s1 + $0x60] sm:$0xff]
  %v30 = vld [vmem:[%s1 + $0x68] sm:$0xff]
  %v31 = vld [vmem:[%s1 + $0x70] sm:$0xff]
  %v32 = vld [vmem:[%s1 + $0x78] sm:$0xff]
  %v33 = vld [vmem:[%s1 + $0x80] sm:$0xff]
  %v34 = vld [vmem:[%s1 + $0x88] sm:$0xff]
  %v35 = vld [vmem:[%s1 + $0x90] sm:$0xff]
  %v36 = vld [vmem:[%s1 + $0x98] sm:$0xff]
  %v37 = vld [vmem:[%s1 + $0xa0] sm:$0xff]
  %v38 = vld [vmem:[%s1 + $0xa8] sm:$0xff]
  %v39 = vld [vmem:[%s1 + $0xb0] sm:$0xff]
  %v40 = vld [vmem:[%s1 + $0xb8] sm:$0xff]
  %v41 = vld [vmem:[%s1 + $0xc0] sm:$0xff]
  %v42 = vld [vmem:[%s1 + $0xc8] sm:$0xff]
  %v43 = vld [vmem:[%s1 + $0xd0] sm:$0xff]
  %v44 = vld [vmem:[%s1 + $0xd8] sm:$0xff]
  %v45 = vld [vmem:[%s1 + $0xe0] sm:$0xff]
  %v46 = vld [vmem:[%s1 + $0xe8] sm:$0xff]
  %v47 = vld [vmem:[%s1 + $0xf0] sm:$0xff]
  %v48 = vld [vmem:[%s1 + $0xf8] sm:$0xff]
  %v51 = vunpack.c.l.s4 1966171168
  %v52 = vunpack.c.0.s8 %v51
  %v53 = vlaneseq
  %v54 = vshrl.u32 %v53, 7
  %v55 = vsub.s32 %v52, %v54
  %v56 = vrot.slane %v16, %v55
  %v57 = vcombine.high %v56, %v56
  %v59 = vunpack.c.l.s4 1966171168
  %v60 = vunpack.c.0.s8 %v59
  %v61 = vlaneseq
  %v62 = vshrl.u32 %v61, 7
  %v63 = vsub.s32 %v60, %v62
  %v64 = vrot.slane %v56, %v63
  %v66 = vunpack.c.l.s4 1966171168
  %v67 = vunpack.c.0.s8 %v66
  %v68 = vlaneseq
  %v69 = vshrl.u32 %v68, 7
  %v70 = vsub.s32 %v67, %v69
  %v71 = vrot.slane %v57, %v70
  %v106 = vunpack.c.l.b16 %v17
  %v107 = vunpack.c.h.b16 %v17
  %v108 = vunpack.c.l.b16 %v18
  %v109 = vunpack.c.h.b16 %v18
  %v110 = vunpack.c.l.b16 %v19
  %v111 = vunpack.c.h.b16 %v19
  %v112 = vunpack.c.l.b16 %v20
  %v113 = vunpack.c.h.b16 %v20
  %v114 = vunpack.c.l.b16 %v21
  %v115 = vunpack.c.h.b16 %v21
  %v116 = vunpack.c.l.b16 %v22
  %v117 = vunpack.c.h.b16 %v22
  %v118 = vunpack.c.l.b16 %v23
  %v119 = vunpack.c.h.b16 %v23
  %v120 = vunpack.c.l.b16 %v24
  %v121 = vunpack.c.h.b16 %v24
  %v122 = vunpack.c.l.b16 %v25
  %v123 = vunpack.c.h.b16 %v25
  %v124 = vunpack.c.l.b16 %v26
  %v125 = vunpack.c.h.b16 %v26
  %v126 = vunpack.c.l.b16 %v27
  %v127 = vunpack.c.h.b16 %v27
  %v128 = vunpack.c.l.b16 %v28
  %v129 = vunpack.c.h.b16 %v28
  %v130 = vunpack.c.l.b16 %v29
  %v131 = vunpack.c.h.b16 %v29
  %v132 = vunpack.c.l.b16 %v30
  %v133 = vunpack.c.h.b16 %v30
  %v134 = vunpack.c.l.b16 %v31
  %v135 = vunpack.c.h.b16 %v31
  %v136 = vunpack.c.l.b16 %v32
  %v137 = vunpack.c.h.b16 %v32
  %v138 = vunpack.c.l.b16 %v33
  %v139 = vunpack.c.h.b16 %v33
  %v140 = vunpack.c.l.b16 %v34
  %v141 = vunpack.c.h.b16 %v34
  %v142 = vunpack.c.l.b16 %v35
  %v143 = vunpack.c.h.b16 %v35
  %v144 = vunpack.c.l.b16 %v36
  %v145 = vunpack.c.h.b16 %v36
  %v146 = vunpack.c.l.b16 %v37
  %v147 = vunpack.c.h.b16 %v37
  %v148 = vunpack.c.l.b16 %v38
  %v149 = vunpack.c.h.b16 %v38
  %v150 = vunpack.c.l.b16 %v39
  %v151 = vunpack.c.h.b16 %v39
  %v152 = vunpack.c.l.b16 %v40
  %v153 = vunpack.c.h.b16 %v40
  %v154 = vunpack.c.l.b16 %v41
  %v155 = vunpack.c.h.b16 %v41
  %v156 = vunpack.c.l.b16 %v42
  %v157 = vunpack.c.h.b16 %v42
  %v158 = vunpack.c.l.b16 %v43
  %v159 = vunpack.c.h.b16 %v43
  %v160 = vunpack.c.l.b16 %v44
  %v161 = vunpack.c.h.b16 %v44
  %v162 = vunpack.c.l.b16 %v45
  %v163 = vunpack.c.h.b16 %v45
  %v164 = vunpack.c.l.b16 %v46
  %v165 = vunpack.c.h.b16 %v46
  %v166 = vunpack.c.l.b16 %v47
  %v167 = vunpack.c.h.b16 %v47
  %v168 = vunpack.c.l.b16 %v48
  %v169 = vunpack.c.h.b16 %v48
  %v170 = vpack.c.b16 %v108, %v106
  %v171 = vpack.c.b16 %v109, %v107
  %v172 = vpack.c.b16 %v112, %v110
  %v173 = vpack.c.b16 %v113, %v111
  %v174 = vpack.c.b16 %v116, %v114
  %v175 = vpack.c.b16 %v117, %v115
  %v176 = vpack.c.b16 %v120, %v118
  %v177 = vpack.c.b16 %v121, %v119
  %v178 = vpack.c.b16 %v124, %v122
  %v179 = vpack.c.b16 %v125, %v123
  %v180 = vpack.c.b16 %v128, %v126
  %v181 = vpack.c.b16 %v129, %v127
  %v182 = vpack.c.b16 %v132, %v130
  %v183 = vpack.c.b16 %v133, %v131
  %v184 = vpack.c.b16 %v136, %v134
  %v185 = vpack.c.b16 %v137, %v135
  %v186 = vpack.c.b16 %v140, %v138
  %v187 = vpack.c.b16 %v141, %v139
  %v188 = vpack.c.b16 %v144, %v142
  %v189 = vpack.c.b16 %v145, %v143
  %v190 = vpack.c.b16 %v148, %v146
  %v191 = vpack.c.b16 %v149, %v147
  %v192 = vpack.c.b16 %v152, %v150
  %v193 = vpack.c.b16 %v153, %v151
  %v194 = vpack.c.b16 %v156, %v154
  %v195 = vpack.c.b16 %v157, %v155
  %v196 = vpack.c.b16 %v160, %v158
  %v197 = vpack.c.b16 %v161, %v159
  %v198 = vpack.c.b16 %v164, %v162
  %v199 = vpack.c.b16 %v165, %v163
  %v200 = vpack.c.b16 %v168, %v166
  %v201 = vpack.c.b16 %v169, %v167
  %234 = vmatprep.subr.bf16.mxu0 %v185
  %235 = vmatpush1.bf16.msra.mxu0 %v184
  %236 = vmatprep.subr.bf16.mxu0 %v183
  %237 = vmatpush1.bf16.msra.mxu0 %v182
  %238 = vmatprep.subr.bf16.mxu0 %v181
  %239 = vmatpush1.bf16.msra.mxu0 %v180
  %240 = vmatprep.subr.bf16.mxu0 %v179
  %241 = vmatpush1.bf16.msra.mxu0 %v178
  %242 = vmatprep.subr.bf16.mxu0 %v177
  %243 = vmatpush1.bf16.msra.mxu0 %v176
  %244 = vmatprep.subr.bf16.mxu0 %v175
  %245 = vmatpush1.bf16.msra.mxu0 %v174
  %246 = vmatprep.subr.bf16.mxu0 %v173
  %247 = vmatpush1.bf16.msra.mxu0 %v172
  %248 = vmatprep.subr.bf16.mxu0 %v171
  %249 = vmatpush1.bf16.msra.mxu0 %v170
  %250 = vmatprep.subr.bf16.mxu0 %v201
  %251 = vmatpush2.bf16.msra.mxu0 %v200
  %252 = vmatprep.subr.bf16.mxu0 %v199
  %253 = vmatpush2.bf16.msra.mxu0 %v198
  %254 = vmatprep.subr.bf16.mxu0 %v197
  %255 = vmatpush2.bf16.msra.mxu0 %v196
  %256 = vmatprep.subr.bf16.mxu0 %v195
  %257 = vmatpush2.bf16.msra.mxu0 %v194
  %258 = vmatprep.subr.bf16.mxu0 %v193
  %259 = vmatpush2.bf16.msra.mxu0 %v192
  %260 = vmatprep.subr.bf16.mxu0 %v191
  %261 = vmatpush2.bf16.msra.mxu0 %v190
  %262 = vmatprep.subr.bf16.mxu0 %v189
  %263 = vmatpush2.bf16.msra.mxu0 %v188
  %264 = vmatprep.subr.bf16.mxu0 %v187
  %265 = vmatpush2.bf16.msra.mxu0 %v186
  %266 = vmatprep.mubr.bf16.mxu0 %v71
  %267 = vmatmul.mubr.bf16.gmra.mxu0 %v64
  %v268 = vpop.f32.mrf.mxu0
  %v269 = vadd.f32 0.0, %v268
  %v270 = vpop.f32.mrf.mxu0
  %v271 = vadd.f32 0.0, %v270
  %v272 = vpop.f32.mrf.mxu0
  %v273 = vpop.f32.mrf.mxu0
  %274 = vdwg.mxu0
  %v275 = vround.ne.pseudo %v269
  %v276 = vround.ne.pseudo %v271
  %v277 = vsub.f32 %v269, %v275
  %v278 = vsub.f32 %v271, %v276
  %v279 = vmul.f32 %v277, %v277
  %v280 = vmul.f32 %v278, %v278
  %v281 = vmul.f32 %v277, %v279
  %v282 = vmul.f32 %v278, %v280
  %v283 = vadd.f32 %v275, %v281
  %v284 = vadd.f32 %v276, %v282
  %v285 = vpack.c.bf16 %v283, %v283
  %v286 = vpack.c.bf16 %v284, %v284
  %v287 = vld [vmem:[%s2] sm:$0xff]
  %v288 = vld [vmem:[%s2 + $0x8] sm:$0xff]
  %v289 = vld [vmem:[%s2 + $0x10] sm:$0xff]
  %v290 = vld [vmem:[%s2 + $0x18] sm:$0xff]
  %v291 = vld [vmem:[%s2 + $0x20] sm:$0xff]
  %v292 = vld [vmem:[%s2 + $0x28] sm:$0xff]
  %v293 = vld [vmem:[%s2 + $0x30] sm:$0xff]
  %v294 = vld [vmem:[%s2 + $0x38] sm:$0xff]
  %v295 = vld [vmem:[%s2 + $0x40] sm:$0xff]
  %v296 = vld [vmem:[%s2 + $0x48] sm:$0xff]
  %v297 = vld [vmem:[%s2 + $0x50] sm:$0xff]
  %v298 = vld [vmem:[%s2 + $0x58] sm:$0xff]
  %v299 = vld [vmem:[%s2 + $0x60] sm:$0xff]
  %v300 = vld [vmem:[%s2 + $0x68] sm:$0xff]
  %v301 = vld [vmem:[%s2 + $0x70] sm:$0xff]
  %v302 = vld [vmem:[%s2 + $0x78] sm:$0xff]
  %v303 = vld [vmem:[%s2 + $0x80] sm:$0xff]
  %v304 = vld [vmem:[%s2 + $0x88] sm:$0xff]
  %v305 = vld [vmem:[%s2 + $0x90] sm:$0xff]
  %v306 = vld [vmem:[%s2 + $0x98] sm:$0xff]
  %v307 = vld [vmem:[%s2 + $0xa0] sm:$0xff]
  %v308 = vld [vmem:[%s2 + $0xa8] sm:$0xff]
  %v309 = vld [vmem:[%s2 + $0xb0] sm:$0xff]
  %v310 = vld [vmem:[%s2 + $0xb8] sm:$0xff]
  %v311 = vld [vmem:[%s2 + $0xc0] sm:$0xff]
  %v312 = vld [vmem:[%s2 + $0xc8] sm:$0xff]
  %v313 = vld [vmem:[%s2 + $0xd0] sm:$0xff]
  %v314 = vld [vmem:[%s2 + $0xd8] sm:$0xff]
  %v315 = vld [vmem:[%s2 + $0xe0] sm:$0xff]
  %v316 = vld [vmem:[%s2 + $0xe8] sm:$0xff]
  %v317 = vld [vmem:[%s2 + $0xf0] sm:$0xff]
  %v318 = vld [vmem:[%s2 + $0xf8] sm:$0xff]
  %v351 = vunpack.c.l.b16 %v287
  %v352 = vunpack.c.h.b16 %v287
  %v353 = vunpack.c.l.b16 %v288
  %v354 = vunpack.c.h.b16 %v288
  %v355 = vunpack.c.l.b16 %v289
  %v356 = vunpack.c.h.b16 %v289
  %v357 = vunpack.c.l.b16 %v290
  %v358 = vunpack.c.h.b16 %v290
  %v359 = vunpack.c.l.b16 %v291
  %v360 = vunpack.c.h.b16 %v291
  %v361 = vunpack.c.l.b16 %v292
  %v362 = vunpack.c.h.b16 %v292
  %v363 = vunpack.c.l.b16 %v293
  %v364 = vunpack.c.h.b16 %v293
  %v365 = vunpack.c.l.b16 %v294
  %v366 = vunpack.c.h.b16 %v294
  %v367 = vunpack.c.l.b16 %v295
  %v368 = vunpack.c.h.b16 %v295
  %v369 = vunpack.c.l.b16 %v296
  %v370 = vunpack.c.h.b16 %v296
  %v371 = vunpack.c.l.b16 %v297
  %v372 = vunpack.c.h.b16 %v297
  %v373 = vunpack.c.l.b16 %v298
  %v374 = vunpack.c.h.b16 %v298
  %v375 = vunpack.c.l.b16 %v299
  %v376 = vunpack.c.h.b16 %v299
  %v377 = vunpack.c.l.b16 %v300
  %v378 = vunpack.c.h.b16 %v300
  %v379 = vunpack.c.l.b16 %v301
  %v380 = vunpack.c.h.b16 %v301
  %v381 = vunpack.c.l.b16 %v302
  %v382 = vunpack.c.h.b16 %v302
  %v383 = vunpack.c.l.b16 %v303
  %v384 = vunpack.c.h.b16 %v303
  %v385 = vunpack.c.l.b16 %v304
  %v386 = vunpack.c.h.b16 %v304
  %v387 = vunpack.c.l.b16 %v305
  %v388 = vunpack.c.h.b16 %v305
  %v389 = vunpack.c.l.b16 %v306
  %v390 = vunpack.c.h.b16 %v306
  %v391 = vunpack.c.l.b16 %v307
  %v392 = vunpack.c.h.b16 %v307
  %v393 = vunpack.c.l.b16 %v308
  %v394 = vunpack.c.h.b16 %v308
  %v395 = vunpack.c.l.b16 %v309
  %v396 = vunpack.c.h.b16 %v309
  %v397 = vunpack.c.l.b16 %v310
  %v398 = vunpack.c.h.b16 %v310
  %v399 = vunpack.c.l.b16 %v311
  %v400 = vunpack.c.h.b16 %v311
  %v401 = vunpack.c.l.b16 %v312
  %v402 = vunpack.c.h.b16 %v312
  %v403 = vunpack.c.l.b16 %v313
  %v404 = vunpack.c.h.b16 %v313
  %v405 = vunpack.c.l.b16 %v314
  %v406 = vunpack.c.h.b16 %v314
  %v407 = vunpack.c.l.b16 %v315
  %v408 = vunpack.c.h.b16 %v315
  %v409 = vunpack.c.l.b16 %v316
  %v410 = vunpack.c.h.b16 %v316
  %v411 = vunpack.c.l.b16 %v317
  %v412 = vunpack.c.h.b16 %v317
  %v413 = vunpack.c.l.b16 %v318
  %v414 = vunpack.c.h.b16 %v318
  %v415 = vpack.c.b16 %v353, %v351
  %v416 = vpack.c.b16 %v354, %v352
  %v417 = vpack.c.b16 %v357, %v355
  %v418 = vpack.c.b16 %v358, %v356
  %v419 = vpack.c.b16 %v361, %v359
  %v420 = vpack.c.b16 %v362, %v360
  %v421 = vpack.c.b16 %v365, %v363
  %v422 = vpack.c.b16 %v366, %v364
  %v423 = vpack.c.b16 %v369, %v367
  %v424 = vpack.c.b16 %v370, %v368
  %v425 = vpack.c.b16 %v373, %v371
  %v426 = vpack.c.b16 %v374, %v372
  %v427 = vpack.c.b16 %v377, %v375
  %v428 = vpack.c.b16 %v378, %v376
  %v429 = vpack.c.b16 %v381, %v379
  %v430 = vpack.c.b16 %v382, %v380
  %v431 = vpack.c.b16 %v385, %v383
  %v432 = vpack.c.b16 %v386, %v384
  %v433 = vpack.c.b16 %v389, %v387
  %v434 = vpack.c.b16 %v390, %v388
  %v435 = vpack.c.b16 %v393, %v391
  %v436 = vpack.c.b16 %v394, %v392
  %v437 = vpack.c.b16 %v397, %v395
  %v438 = vpack.c.b16 %v398, %v396
  %v439 = vpack.c.b16 %v401, %v399
  %v440 = vpack.c.b16 %v402, %v400
  %v441 = vpack.c.b16 %v405, %v403
  %v442 = vpack.c.b16 %v406, %v404
  %v443 = vpack.c.b16 %v409, %v407
  %v444 = vpack.c.b16 %v410, %v408
  %v445 = vpack.c.b16 %v413, %v411
  %v446 = vpack.c.b16 %v414, %v412
  %479 = vmatprep.subr.bf16.mxu0 %v430
  %480 = vmatpush1.bf16.msra.mxu0 %v429
  %481 = vmatprep.subr.bf16.mxu0 %v428
  %482 = vmatpush1.bf16.msra.mxu0 %v427
  %483 = vmatprep.subr.bf16.mxu0 %v426
  %484 = vmatpush1.bf16.msra.mxu0 %v425
  %485 = vmatprep.subr.bf16.mxu0 %v424
  %486 = vmatpush1.bf16.msra.mxu0 %v423
  %487 = vmatprep.subr.bf16.mxu0 %v422
  %488 = vmatpush1.bf16.msra.mxu0 %v421
  %489 = vmatprep.subr.bf16.mxu0 %v420
  %490 = vmatpush1.bf16.msra.mxu0 %v419
  %491 = vmatprep.subr.bf16.mxu0 %v418
  %492 = vmatpush1.bf16.msra.mxu0 %v417
  %493 = vmatprep.subr.bf16.mxu0 %v416
  %494 = vmatpush1.bf16.msra.mxu0 %v415
  %495 = vmatprep.subr.bf16.mxu0 %v446
  %496 = vmatpush2.bf16.msra.mxu0 %v445
  %497 = vmatprep.subr.bf16.mxu0 %v444
  %498 = vmatpush2.bf16.msra.mxu0 %v443
  %499 = vmatprep.subr.bf16.mxu0 %v442
  %500 = vmatpush2.bf16.msra.mxu0 %v441
  %501 = vmatprep.subr.bf16.mxu0 %v440
  %502 = vmatpush2.bf16.msra.mxu0 %v439
  %503 = vmatprep.subr.bf16.mxu0 %v438
  %504 = vmatpush2.bf16.msra.mxu0 %v437
  %505 = vmatprep.subr.bf16.mxu0 %v436
  %506 = vmatpush2.bf16.msra.mxu0 %v435
  %507 = vmatprep.subr.bf16.mxu0 %v434
  %508 = vmatpush2.bf16.msra.mxu0 %v433
  %509 = vmatprep.subr.bf16.mxu0 %v432
  %510 = vmatpush2.bf16.msra.mxu0 %v431
  %511 = vmatprep.mubr.bf16.mxu0 %v286
  %512 = vmatmul.mubr.bf16.gmra.mxu0 %v285
  %v513 = vpop.f32.mrf.mxu0
  %v514 = vadd.f32 128.0, %v513
  %v515 = vpop.f32.mrf.mxu0
  %v516 = vadd.f32 128.0, %v515
  %v517 = vpop.f32.mrf.mxu0
  %v518 = vpop.f32.mrf.mxu0
  %519 = vdwg.mxu0
  %v522 = vcombine.low %v514, %v516
  %v524 = vunpack.c.l.s4 1983009808
  %v525 = vunpack.c.0.s8 %v524
  %v526 = vlaneseq
  %v527 = vshrl.u32 %v526, 7
  %v528 = vsub.s32 %v525, %v527
  %v529 = vrot.slane %v522, %v528
  %531 = vst [vmem:[%s3] sm:$0xf] %v529
  // Predicated region
  $region14: #{_lambda_.5} parent=0 // pred_check
    _
  $region15: #{_lambda_.5} parent=0 // pred_check_branch
    %533 = sbr.rel (0) target = $region17
  $region16: #{_lambda_.5} parent=0 // pred_region
    _
  $region17: #{_lambda_.5} parent=0 // pred_fallthru
    _
  // Predicated region
  $region18: #{_lambda_.5} parent=0 // pred_check
    _
  $region19: #{_lambda_.5} parent=0 // pred_check_branch
    %535 = sbr.rel (0) target = $region21
  $region20: #{_lambda_.5} parent=0 // pred_region
    _
  $region21: #{_lambda_.5} parent=0 // pred_fallthru
    _

// kernel: _lambda_.7
$region0: #{_lambda_.7}
  #allocation0 [shape = 'u32[]', space=smem, size = 0x4, offset = 0x4, fixed_abs, tag = 'smem constant byte address 0x4 - core index']
  #allocation1 [shape = 'u32[144,128]{1,0:T(1,128)}', space=vmem, size = 0x12000, scoped, tag = 'internal scratch']
  %s0 = inlined_call_operand.vmem [shape: f32[2,8,32], index: 0, kind: input, shape index: {}]
  %s1 = inlined_call_operand.vmem [shape: f32[2,2,8,8], index: 1, kind: input, shape index: {}]
  %s2 = inlined_call_operand.vmem [shape: f32[8,32], index: 2, kind: input, shape index: {}]
  %s3 = inlined_call_operand.vmem [shape: f32[2,3,8,32], index: 3, kind: output, shape index: {}]
  %s4 = sld [smem:[#allocation0]]
  $region83: #{_lambda_.7} parent=0
    _
  %s6 = ssub.s32 1, %s4
  %s7 = scalar_select 0, %s6, %s4
  $region1: #{_lambda_.7} parent=0
    #allocation2 [shape = 'u8[16384]{0}', space=vmem, size = 0x4000, scoped, tag = 'input window, operand 1']
    loop: start=0, step=1, limit=4
    $region2: #{_lambda_.7} parent=1 // loop_pre_header
      _
    $region3: #{_lambda_.7} parent=1 // loop_header
      %s9 = sphi 0, %s13
      %p10 = scmp.ge.s32.totalorder %s9, 4
      %s16 = sphi 0, %s28
      %s17 = sphi 0, %s24
      %s18 = sphi 0, %s16
      %s19 = sphi 0, %s17
      %s20 = sphi 0, %s18
      %s21 = sphi 0, %s19
      %s33 = sphi 0, %s35
      %s36 = sphi 0, %s33
      %s37 = sphi 0, %s36
      %s53 = sphi 0, %s37
      %s61 = sphi 0, %s63
      %s64 = sphi 0, %s61
      %s65 = sphi 0, %s64
      %s81 = sphi 0, %s65
      %s85 = sphi 0, %s85
      %s87 = sphi 0, %s85
      %s88 = sphi 0, %s87
      %s102 = sphi 0, %s88
      %s110 = sphi 0, %s112
      %s113 = sphi 0, %s110
      %s114 = sphi 0, %s113
      %s130 = sphi 0, %s114
    $region4: #{_lambda_.7} parent=1 // loop_header_branch
      %12 = sbr.rel (%p10) target = $region8
    $region5: #{_lambda_.7} parent=1 // loop_body
      %s14 = ssub.s32 %s9, 1
      %s15 = ssub.s32 %s9, 2
      %s22 = sadd.s32 1, %s17
      %p23 = scmp.ge.s32.totalorder %s22, 1
      %s24 = scalar_select %p23, 0, %s22
      %s25 = sadd.s32 1, %s16
      %s26 = scalar_select %p23, %s25, %s16
      %p27 = scmp.ge.s32.totalorder %s26, 2
      %s28 = scalar_select %p27, 0, %s26
      %s29 = ssub.s32 %s16, %s28
      %s30 = ssub.s32 %s17, %s24
      %s31 = sor.u32 %s29, %s30
      %p32 = scmp.eq.s32.totalorder %s31, 0
      %s34 = sadd.s32 %s33, 1
      %s35 = scalar_select %p32, %s33, %s34
      %p38 = pneg %p32
      %p39 = scmp.eq.s32.totalorder %s9, 1
      %p40 = por %p38, %p39
      %p41 = scmp.ne.s32.totalorder %s33, %s36
      %p42 = scmp.eq.s32.totalorder %s9, 0
      %p43 = por %p41, %p42
      %p44 = scmp.ne.s32.totalorder %s33, %s36
      %p45 = scmp.eq.s32.totalorder %s14, 1
      %p46 = por %p44, %p45
      %p47 = scmp.ne.s32.totalorder %s36, %s37
      %p48 = scmp.eq.s32.totalorder %s14, 0
      %p49 = por %p47, %p48
      %p50 = scmp.ne.s32.totalorder %s36, %s37
      %p51 = scmp.eq.s32.totalorder %s15, 1
      %p52 = por %p50, %p51
      %p54 = scmp.ne.s32.totalorder %s37, %s53
      %p55 = scmp.eq.s32.totalorder %s15, 0
      %p56 = por %p54, %p55
      %s57 = ssub.s32 %s16, %s28
      %s58 = ssub.s32 %s17, %s24
      %s59 = sor.u32 %s57, %s58
      %p60 = scmp.eq.s32.totalorder %s59, 0
      %s62 = sadd.s32 %s61, 1
      %s63 = scalar_select %p60, %s61, %s62
      %p66 = pneg %p60
      %p67 = scmp.eq.s32.totalorder %s9, 1
      %p68 = por %p66, %p67
      %p69 = scmp.ne.s32.totalorder %s61, %s64
      %p70 = scmp.eq.s32.totalorder %s9, 0
      %p71 = por %p69, %p70
      %p72 = scmp.ne.s32.totalorder %s61, %s64
      %p73 = scmp.eq.s32.totalorder %s14, 1
      %p74 = por %p72, %p73
      %p75 = scmp.ne.s32.totalorder %s64, %s65
      %p76 = scmp.eq.s32.totalorder %s14, 0
      %p77 = por %p75, %p76
      %p78 = scmp.ne.s32.totalorder %s64, %s65
      %p79 = scmp.eq.s32.totalorder %s15, 1
      %p80 = por %p78, %p79
      %p82 = scmp.ne.s32.totalorder %s65, %s81
      %p83 = scmp.eq.s32.totalorder %s15, 0
      %p84 = por %p82, %p83
      %s86 = sadd.s32 %s85, 1
      %p89 = scmp.eq.s32.totalorder %s9, 1
      %p90 = scmp.ne.s32.totalorder %s85, %s87
      %p91 = scmp.eq.s32.totalorder %s9, 0
      %p92 = por %p90, %p91
      %p93 = scmp.ne.s32.totalorder %s85, %s87
      %p94 = scmp.eq.s32.totalorder %s14, 1
      %p95 = por %p93, %p94
      %p96 = scmp.ne.s32.totalorder %s87, %s88
      %p97 = scmp.eq.s32.totalorder %s14, 0
      %p98 = por %p96, %p97
      %p99 = scmp.ne.s32.totalorder %s87, %s88
      %p100 = scmp.eq.s32.totalorder %s15, 1
      %p101 = por %p99, %p100
      %p103 = scmp.ne.s32.totalorder %s88, %s102
      %p104 = scmp.eq.s32.totalorder %s15, 0
      %p105 = por %p103, %p104
      %s106 = ssub.s32 %s16, %s28
      %s107 = ssub.s32 %s17, %s24
      %s108 = sor.u32 %s106, %s107
      %p109 = scmp.eq.s32.totalorder %s108, 0
      %s111 = sadd.s32 %s110, 1
      %s112 = scalar_select %p109, %s110, %s111
      %p115 = pneg %p109
      %p116 = scmp.eq.s32.totalorder %s9, 1
      %p117 = por %p115, %p116
      %p118 = scmp.ne.s32.totalorder %s110, %s113
      %p119 = scmp.eq.s32.totalorder %s9, 0
      %p120 = por %p118, %p119
      %p121 = scmp.ne.s32.totalorder %s110, %s113
      %p122 = scmp.eq.s32.totalorder %s14, 1
      %p123 = por %p121, %p122
      %p124 = scmp.ne.s32.totalorder %s113, %s114
      %p125 = scmp.eq.s32.totalorder %s14, 0
      %p126 = por %p124, %p125
      %p127 = scmp.ne.s32.totalorder %s113, %s114
      %p128 = scmp.eq.s32.totalorder %s15, 1
      %p129 = por %p127, %p128
      %p131 = scmp.ne.s32.totalorder %s114, %s130
      %p132 = scmp.eq.s32.totalorder %s15, 0
      %p133 = por %p131, %p132
      %p134 = scmp.le.s32.totalorder 1, %s9
      %p135 = scmp.lt.s32.totalorder %s9, 3
      %p136 = pnand %p134, %p135
      %p137 = pneg %p136
      // Predicated region
      $region9: #{_lambda_.7} parent=5 // pred_check
        _
      $region10: #{_lambda_.7} parent=5 // pred_check_branch
        %139 = sbr.rel (%p136) target = $region12
      $region11: #{_lambda_.7} parent=5 // pred_region
        %s140 = ssub.s32 %s9, 1
        // Predicated region
        $region13: #{_lambda_.7} parent=11 // pred_check
          %p141 = pneg %p98
        $region14: #{_lambda_.7} parent=11 // pred_check_branch
          %143 = sbr.rel (%p141) target = $region16
        $region15: #{_lambda_.7} parent=11 // pred_region
          _
        $region16: #{_lambda_.7} parent=11 // pred_fallthru
          _
      $region12: #{_lambda_.7} parent=5 // pred_fallthru
        _
      %p144 = scmp.lt.s32.totalorder %s9, 2
      // Predicated region
      $region17: #{_lambda_.7} parent=5 // pred_check
        %p145 = pneg %p144
      $region18: #{_lambda_.7} parent=5 // pred_check_branch
        %147 = sbr.rel (%p145) target = $region20
      $region19: #{_lambda_.7} parent=5 // pred_region
        // Predicated region
        $region21: #{_lambda_.7} parent=19 // pred_check
          %p148 = pneg %p43
        $region22: #{_lambda_.7} parent=19 // pred_check_branch
          %150 = sbr.rel (%p148) target = $region24
        $region23: #{_lambda_.7} parent=19 // pred_region
          %p151 = scmp.lt.s32.totalorder %s16, 1
          %s152 = scalar_select %p151, %s16, 1
          %p153 = scmp.lt.s32.totalorder %s17, 0
          %s154 = scalar_select %p153, %s17, 0
          %s155 = sadd.s32 %s154, %s152
          %s156 = smul.addr %s155, 8
          %s157 = scalar_lea.vmem %s0, %s156
        $region24: #{_lambda_.7} parent=19 // pred_fallthru
          _
        // Predicated region
        $region25: #{_lambda_.7} parent=19 // pred_check
          %p158 = pneg %p71
        $region26: #{_lambda_.7} parent=19 // pred_check_branch
          %160 = sbr.rel (%p158) target = $region28
        $region27: #{_lambda_.7} parent=19 // pred_region
          %s161 = sand.u32 %s61, 1
          %s162 = sand.u32 %s61, 1
          %s163 = smul.addr %s162, 16
          %s164 = scalar_lea.vmem [#allocation2], %s163
          %s165 = sadd.s32 %s17, %s16
          %s166 = smul.addr %s165, 8
          %s167 = scalar_lea.vmem %s1, %s166
          // Predicated region
          $region29: #{_lambda_.7} parent=27 // pred_check
            _
          $region30: #{_lambda_.7} parent=27 // pred_check_branch
            %169 = sbr.rel (0) target = $region32
          $region31: #{_lambda_.7} parent=27 // pred_region
            // Predicated region
            $region33: #{_lambda_.7} parent=31 // pred_check
              _
            $region34: #{_lambda_.7} parent=31 // pred_check_branch
              %171 = sbr.rel (0) target = $region36
            $region35: #{_lambda_.7} parent=31 // pred_region
              // Predicated region
              $region48: #{_lambda_.7} parent=35 // pred_check
                _
              $region49: #{_lambda_.7} parent=35 // pred_check_branch
                %189 = sbr.rel (0) target = $region51
              $region50: #{_lambda_.7} parent=35 // pred_region
                loop: start=0, step=1, limit=1
                $region52: #{_lambda_.7} parent=50 // loop_pre_header
                  _
                $region53: #{_lambda_.7} parent=50 // loop_header
                  %s191 = sphi 0, %s195
                  %p192 = scmp.ge.s32.totalorder %s191, 1
                  %s196 = sphi %s167, %s167
                  %s197 = sphi %s164, %s164
                $region54: #{_lambda_.7} parent=50 // loop_header_branch
                  %194 = sbr.rel (%p192) target = $region58
                $region55: #{_lambda_.7} parent=50 // loop_body
                  %v198 = vld [vmem:[%s196] sm:$0xff]
                  %199 = vst [vmem:[%s197] sm:$0xff] %v198
                  %v200 = vld [vmem:[%s196 + $0x10] sm:$0xff]
                  %201 = vst [vmem:[%s197 + $0x8] sm:$0xff] %v200
                $region56: #{_lambda_.7} parent=50 // loop_footer
                  %s195 = sadd.s32 1, %s191
                $region57: #{_lambda_.7} parent=50 // loop_footer_branch
                  %190 = sbr.rel target = $region53
                $region58: #{_lambda_.7} parent=50 // loop_exit
                  _
              $region51: #{_lambda_.7} parent=35 // pred_fallthru
                _
              // Predicated region
              $region59: #{_lambda_.7} parent=35 // pred_check
                _
              $region60: #{_lambda_.7} parent=35 // pred_check_branch
                %203 = sbr.rel target = $region62
              $region61: #{_lambda_.7} parent=35 // pred_region
                _
              $region62: #{_lambda_.7} parent=35 // pred_fallthru
                _
            $region36: #{_lambda_.7} parent=31 // pred_fallthru
              _
            // Predicated region
            $region37: #{_lambda_.7} parent=31 // pred_check
              _
            $region38: #{_lambda_.7} parent=31 // pred_check_branch
              %173 = sbr.rel target = $region40
            $region39: #{_lambda_.7} parent=31 // pred_region
              %s175 = ssub.s32 256, 1
              loop: start=0, step=1, limit=1
              $region41: #{_lambda_.7} parent=39 // loop_pre_header
                _
              $region42: #{_lambda_.7} parent=39 // loop_header
                %s177 = sphi 0, %s181
                %p178 = scmp.ge.s32.totalorder %s177, 1
                %s182 = sphi %s167, %s167
                %s183 = sphi %s164, %s164
              $region43: #{_lambda_.7} parent=39 // loop_header_branch
                %180 = sbr.rel (%p178) target = $region47
              $region44: #{_lambda_.7} parent=39 // loop_body
                %v184 = vld [vmem:[%s182] sm:%s175]
                %185 = vst [vmem:[%s183] sm:%s175] %v184
                %v186 = vld [vmem:[%s182 + $0x10] sm:%s175]
                %187 = vst [vmem:[%s183 + $0x8] sm:%s175] %v186
              $region45: #{_lambda_.7} parent=39 // loop_footer
                %s181 = sadd.s32 1, %s177
              $region46: #{_lambda_.7} parent=39 // loop_footer_branch
                %176 = sbr.rel target = $region42
              $region47: #{_lambda_.7} parent=39 // loop_exit
                _
            $region40: #{_lambda_.7} parent=31 // pred_fallthru
              _
          $region32: #{_lambda_.7} parent=27 // pred_fallthru
            _
          %204 = vnop
        $region28: #{_lambda_.7} parent=19 // pred_fallthru
          _
      $region20: #{_lambda_.7} parent=5 // pred_fallthru
        _
      %p205 = scmp.le.s32.totalorder 1, %s9
      %p206 = scmp.lt.s32.totalorder %s9, 3
      %p207 = pnand %p205, %p206
      %p208 = pneg %p207
      // Predicated region
      $region63: #{_lambda_.7} parent=5 // pred_check
        _
      $region64: #{_lambda_.7} parent=5 // pred_check_branch
        %210 = sbr.rel (%p207) target = $region66
      $region65: #{_lambda_.7} parent=5 // pred_region
        %s211 = ssub.s32 %s9, 1
        %s212 = sand.u32 %s64, 1
        %s213 = sand.u32 %s64, 1
        %s214 = smul.addr %s213, 16
        %s215 = scalar_lea.vmem [#allocation2], %s214
        // Predicated region
        $region67: #{_lambda_.7} parent=65 // pred_check
          %p216 = pneg %p77
        $region68: #{_lambda_.7} parent=65 // pred_check_branch
          %218 = sbr.rel (%p216) target = $region70
        $region69: #{_lambda_.7} parent=65 // pred_region
          _
        $region70: #{_lambda_.7} parent=65 // pred_fallthru
          _
        %p219 = scmp.lt.s32.totalorder %s18, 1
        %s220 = scalar_select %p219, %s18, 1
        %p221 = scmp.lt.s32.totalorder %s19, 0
        %s222 = scalar_select %p221, %s19, 0
        %s223 = sadd.s32 %s222, %s220
        %s224 = smul.addr %s223, 8
        %s225 = scalar_lea.vmem %s0, %s224
        %p226 = pneg %p49
        %p227 = pneg %p46
        %s228 = sand.u32 %s64, 1
        %s229 = sand.u32 %s64, 1
        %s230 = smul.addr %s229, 16
        %s231 = scalar_lea.vmem [#allocation2], %s230
        %p232 = pneg %p77
        %p233 = pneg %p74
        %p234 = pneg %p98
        %p235 = pneg %p95
        %p236 = pneg %p126
        %p237 = pneg %p123
        %p238 = scmp.lt.s32.totalorder %s18, 1
        %s239 = scalar_select %p238, %s18, 1
        %p240 = scmp.lt.s32.totalorder %s19, 0
        %s241 = scalar_select %p240, %s19, 0
        %s242 = smul.addr %s239, 3
        %s243 = sadd.s32 %s241, %s242
        %s244 = smul.addr %s243, 8
        %s245 = scalar_lea.vmem %s3, %s244
        %p246 = scmp.lt.s32.totalorder %s18, 1
        %s247 = scalar_select %p246, %s18, 1
        %p248 = scmp.lt.s32.totalorder %s19, 0
        %s249 = scalar_select %p248, %s19, 0
        %s250 = sadd.s32 %s249, %s247
        %s251 = smul.addr %s250, 8
        %s252 = scalar_lea.vmem %s0, %s251
        %p253 = scmp.lt.s32.totalorder %s18, 1
        %s254 = scalar_select %p253, %s18, 1
        %p255 = scmp.lt.s32.totalorder %s19, 0
        %s256 = scalar_select %p255, %s19, 0
        %s257 = smul.addr %s254, 3
        %s258 = sadd.s32 %s256, %s257
        %s259 = smul.addr %s258, 8
        %s260 = scalar_lea.vmem %s3, %s259
        %v261 = vld [vmem:[%s252] sm:$0xff]
        %v262 = vld [vmem:[%s2] sm:$0xff]
        %v263 = vld [vmem:[%s215] sm:$0xff]
        %vm264 = vcmask 64512
        %v266 = vsel %vm264, %v263, 0
        %268 = vmatprep.subr.mxu0 0.0
        %269 = vmatpush1.msra.mxu0 0.0
        %270 = vmatprep.subr.mxu0 0.0
        %271 = vmatpush1.msra.mxu0 0.0
        %272 = vmatprep.subr.mxu0 0.0
        %273 = vmatpush1.msra.mxu0 0.0
        %274 = vmatprep.subr.mxu0 0.0
        %275 = vmatpush1.msra.mxu0 0.0
        %276 = vmatprep.subr.mxu0 0.0
        %277 = vmatpush1.msra.mxu0 0.0
        %278 = vmatprep.subr.mxu0 0.0
        %279 = vmatpush1.msra.mxu0 0.0
        %280 = vmatprep.subr.mxu0 0.0
        %281 = vmatpush1.msra.mxu0 0.0
        %282 = vmatprep.subr.mxu0 0.0
        %283 = vmatpush1.msra.mxu0 0.0
        %284 = vmatprep.subr.mxu0 0.0
        %285 = vmatpush1.msra.mxu0 0.0
        %286 = vmatprep.subr.mxu0 0.0
        %287 = vmatpush1.msra.mxu0 0.0
        %288 = vmatprep.subr.mxu0 0.0
        %289 = vmatpush1.msra.mxu0 0.0
        %290 = vmatprep.subr.mxu0 0.0
        %291 = vmatpush1.msra.mxu0 0.0
        %292 = vmatprep.subr.mxu0 0.0
        %293 = vmatpush1.msra.mxu0 0.0
        %294 = vmatprep.subr.mxu0 0.0
        %295 = vmatpush1.msra.mxu0 0.0
        %296 = vmatprep.subr.mxu0 0.0
        %297 = vmatpush1.msra.mxu0 0.0
        %298 = vmatprep.subr.mxu0 0.0
        %299 = vmatpush1.msra.mxu0 %v262
        %300 = vmatprep.subr.mxu0 0.0
        %301 = vmatpush2.msra.mxu0 0.0
        %302 = vmatprep.subr.mxu0 0.0
        %303 = vmatpush2.msra.mxu0 0.0
        %304 = vmatprep.subr.mxu0 0.0
        %305 = vmatpush2.msra.mxu0 0.0
        %306 = vmatprep.subr.mxu0 0.0
        %307 = vmatpush2.msra.mxu0 0.0
        %308 = vmatprep.subr.mxu0 0.0
        %309 = vmatpush2.msra.mxu0 0.0
        %310 = vmatprep.subr.mxu0 0.0
        %311 = vmatpush2.msra.mxu0 0.0
        %312 = vmatprep.subr.mxu0 0.0
        %313 = vmatpush2.msra.mxu0 0.0
        %314 = vmatprep.subr.mxu0 0.0
        %315 = vmatpush2.msra.mxu0 0.0
        %316 = vmatprep.subr.mxu0 0.0
        %317 = vmatpush2.msra.mxu0 0.0
        %318 = vmatprep.subr.mxu0 0.0
        %319 = vmatpush2.msra.mxu0 0.0
        %320 = vmatprep.subr.mxu0 0.0
        %321 = vmatpush2.msra.mxu0 0.0
        %322 = vmatprep.subr.mxu0 0.0
        %323 = vmatpush2.msra.mxu0 0.0
        %324 = vmatprep.subr.mxu0 0.0
        %325 = vmatpush2.msra.mxu0 0.0
        %326 = vmatprep.subr.mxu0 0.0
        %327 = vmatpush2.msra.mxu0 0.0
        %328 = vmatprep.subr.mxu0 0.0
        %329 = vmatpush2.msra.mxu0 0.0
        %330 = vmatprep.subr.mxu0 0.0
        %331 = vmatpush2.msra.mxu0 0.0
        %332 = vmatprep.mubr.f32.mxu0 0.0
        %333 = vmatmul.mubr.f32.gmra.mxu0 %v266
        %v334 = vpop.f32.mrf.mxu0
        %v335 = vadd.f32 0.0, %v334
        %v336 = vpop.f32.mrf.mxu0
        %337 = vdwg.mxu0
        %v338 = vsub.f32 %v335, 128.0
        %s339 = scalar_lea.vmem %s215, 8 [#allocation2]
        %v340 = vld [vmem:[%s339] sm:$0xff]
        %v342 = vsel %vm264, %v340, 0
        %344 = vmatprep.subr.mxu0 0.0
        %345 = vmatpush1.msra.mxu0 0.0
        %346 = vmatprep.subr.mxu0 0.0
        %347 = vmatpush1.msra.mxu0 0.0
        %348 = vmatprep.subr.mxu0 0.0
        %349 = vmatpush1.msra.mxu0 0.0
        %350 = vmatprep.subr.mxu0 0.0
        %351 = vmatpush1.msra.mxu0 0.0
        %352 = vmatprep.subr.mxu0 0.0
        %353 = vmatpush1.msra.mxu0 0.0
        %354 = vmatprep.subr.mxu0 0.0
        %355 = vmatpush1.msra.mxu0 0.0
        %356 = vmatprep.subr.mxu0 0.0
        %357 = vmatpush1.msra.mxu0 0.0
        %358 = vmatprep.subr.mxu0 0.0
        %359 = vmatpush1.msra.mxu0 0.0
        %360 = vmatprep.subr.mxu0 0.0
        %361 = vmatpush1.msra.mxu0 0.0
        %362 = vmatprep.subr.mxu0 0.0
        %363 = vmatpush1.msra.mxu0 0.0
        %364 = vmatprep.subr.mxu0 0.0
        %365 = vmatpush1.msra.mxu0 0.0
        %366 = vmatprep.subr.mxu0 0.0
        %367 = vmatpush1.msra.mxu0 0.0
        %368 = vmatprep.subr.mxu0 0.0
        %369 = vmatpush1.msra.mxu0 0.0
        %370 = vmatprep.subr.mxu0 0.0
        %371 = vmatpush1.msra.mxu0 0.0
        %372 = vmatprep.subr.mxu0 0.0
        %373 = vmatpush1.msra.mxu0 0.0
        %374 = vmatprep.subr.mxu0 0.0
        %375 = vmatpush1.msra.mxu0 %v262
        %376 = vmatprep.subr.mxu0 0.0
        %377 = vmatpush2.msra.mxu0 0.0
        %378 = vmatprep.subr.mxu0 0.0
        %379 = vmatpush2.msra.mxu0 0.0
        %380 = vmatprep.subr.mxu0 0.0
        %381 = vmatpush2.msra.mxu0 0.0
        %382 = vmatprep.subr.mxu0 0.0
        %383 = vmatpush2.msra.mxu0 0.0
        %384 = vmatprep.subr.mxu0 0.0
        %385 = vmatpush2.msra.mxu0 0.0
        %386 = vmatprep.subr.mxu0 0.0
        %387 = vmatpush2.msra.mxu0 0.0
        %388 = vmatprep.subr.mxu0 0.0
        %389 = vmatpush2.msra.mxu0 0.0
        %390 = vmatprep.subr.mxu0 0.0
        %391 = vmatpush2.msra.mxu0 0.0
        %392 = vmatprep.subr.mxu0 0.0
        %393 = vmatpush2.msra.mxu0 0.0
        %394 = vmatprep.subr.mxu0 0.0
        %395 = vmatpush2.msra.mxu0 0.0
        %396 = vmatprep.subr.mxu0 0.0
        %397 = vmatpush2.msra.mxu0 0.0
        %398 = vmatprep.subr.mxu0 0.0
        %399 = vmatpush2.msra.mxu0 0.0
        %400 = vmatprep.subr.mxu0 0.0
        %401 = vmatpush2.msra.mxu0 0.0
        %402 = vmatprep.subr.mxu0 0.0
        %403 = vmatpush2.msra.mxu0 0.0
        %404 = vmatprep.subr.mxu0 0.0
        %405 = vmatpush2.msra.mxu0 0.0
        %406 = vmatprep.subr.mxu0 0.0
        %407 = vmatpush2.msra.mxu0 0.0
        %408 = vmatprep.mubr.f32.mxu0 0.0
        %409 = vmatmul.mubr.f32.gmra.mxu0 %v342
        %v410 = vpop.f32.mrf.mxu0
        %v411 = vadd.f32 0.0, %v410
        %v412 = vpop.f32.mrf.mxu0
        %413 = vdwg.mxu0
        %v414 = vsub.f32 %v411, 128.0
        %v415 = vmul.f32 %v414, 1.402
        %v416 = vadd.f32 %v261, %v415
        %v417 = vmax.f32 %v416, 0.0
        %v418 = vmin.f32 %v417, 255.0
        %v419 = vmul.f32 %v418, 0.003921569
        %vm420 = vcmask 261120
        %421 = vst.msk [vmem:[%s260] sm:$0xff] %vm420, %v419
        %v422 = vmul.f32 %v338, 0.344136
        %v423 = vsub.f32 %v261, %v422
        %v424 = vmul.f32 %v414, 0.714136
        %v425 = vsub.f32 %v423, %v424
        %v426 = vmax.f32 %v425, 0.0
        %v427 = vmin.f32 %v426, 255.0
        %v428 = vmul.f32 %v427, 0.003921569
        %s429 = scalar_lea.vmem %s260, 8
        %430 = vst.msk [vmem:[%s429] sm:$0xff] %vm420, %v428
        %v431 = vmul.f32 %v338, 1.772
        %v432 = vadd.f32 %v261, %v431
        %v433 = vmax.f32 %v432, 0.0
        %v434 = vmin.f32 %v433, 255.0
        %v435 = vmul.f32 %v434, 0.003921569
        %s436 = scalar_lea.vmem %s260, 16
        %437 = vst.msk [vmem:[%s436] sm:$0xff] %vm420, %v435
        %p438 = scmp.lt.s32.totalorder %s18, 1
        %s439 = scalar_select %p438, %s18, 1
        %p440 = scmp.lt.s32.totalorder %s19, 0
        %s441 = scalar_select %p440, %s19, 0
        %s442 = smul.addr %s439, 3
        %s443 = sadd.s32 %s441, %s442
        %s444 = smul.addr %s443, 8
        %s445 = scalar_lea.vmem %s3, %s444
        // Predicated region
        $region71: #{_lambda_.7} parent=65 // pred_check
          %p446 = pneg %p123
        $region72: #{_lambda_.7} parent=65 // pred_check_branch
          %448 = sbr.rel (%p446) target = $region74
        $region73: #{_lambda_.7} parent=65 // pred_region
          _
        $region74: #{_lambda_.7} parent=65 // pred_fallthru
          _
      $region66: #{_lambda_.7} parent=5 // pred_fallthru
        _
      %p449 = scmp.le.s32.totalorder 2, %s9
      // Predicated region
      $region75: #{_lambda_.7} parent=5 // pred_check
        %p450 = pneg %p449
      $region76: #{_lambda_.7} parent=5 // pred_check_branch
        %452 = sbr.rel (%p450) target = $region78
      $region77: #{_lambda_.7} parent=5 // pred_region
        %s453 = ssub.s32 %s9, 2
        // Predicated region
        $region79: #{_lambda_.7} parent=77 // pred_check
          %p454 = pneg %p129
        $region80: #{_lambda_.7} parent=77 // pred_check_branch
          %456 = sbr.rel (%p454) target = $region82
        $region81: #{_lambda_.7} parent=77 // pred_region
          %p457 = scmp.lt.s32.totalorder %s20, 1
          %s458 = scalar_select %p457, %s20, 1
          %p459 = scmp.lt.s32.totalorder %s21, 0
          %s460 = scalar_select %p459, %s21, 0
          %s461 = smul.addr %s458, 3
          %s462 = sadd.s32 %s460, %s461
          %s463 = smul.addr %s462, 8
          %s464 = scalar_lea.vmem %s3, %s463
        $region82: #{_lambda_.7} parent=77 // pred_fallthru
          _
      $region78: #{_lambda_.7} parent=5 // pred_fallthru
        _
    $region6: #{_lambda_.7} parent=1 // loop_footer
      %s13 = sadd.s32 1, %s9
    $region7: #{_lambda_.7} parent=1 // loop_footer_branch
      %8 = sbr.rel target = $region3
    $region8: #{_lambda_.7} parent=1 // loop_exit
      _

</llo_original>
